<compile_context>
chip_gen: v6e
topology: v6e:2x2x1
jax: 0.10.0
libtpu: 0.0.40
codegen_flags: <defaults>
</compile_context>

<pallas_src>
import functools

import jax
import jax.numpy as jnp
import numpy as np
from jax import lax
from jax.experimental import pallas as pl
from jax.experimental.pallas import tpu as pltpu


def _round_up(x, m):
    return ((x + m - 1) // m) * m


def _conv3d_relu_kernel(x_ref, w_ref, b_ref, o_ref, col_ref, *, d, T, Wp, L, Cinp):
    """Fused Conv3d(k=3, dilation=(d,1,1), 'same') + bias + ReLU, one batch elem.

    x_ref  : (Cinp, (Tp+2)*L) bf16  channels on sublanes; each frame = L lanes
                                    (flattened Hp*Wp plane + zero tail); one zero
                                    frame of lane halo before/after the clip.
    w_ref  : (Cout, 27*Cinp)  bf16  taps pre-flattened along K wrapper-side.
    b_ref  : (Cout, 1)        f32
    o_ref  : (Cout, T*L)      f32   lane-dense output (T*L lanes, 128-multiple).
    col_ref: (27*Cinp, T*L)   bf16  im2col slab (VMEM scratch).
    """
    TL = T * L

    # ---- 1) im2col: 27 static lane-window slices of the flat input, each stored
    #         as one full (Cinp=16, T*L) bf16-tile-aligned slab. ----------------
    for kt in range(3):
        for kh in range(3):
            for kw in range(3):
                tap = (kt * 3 + kh) * 3 + kw
                off = (kh - 1) * Wp + (kw - 1)          # flat spatial shift
                start = (1 + kt * d) * L + off          # +1: pre-pad halo frame
                col_ref[pl.ds(tap * Cinp, Cinp), :] = x_ref[:, pl.ds(start, TL)]

    # ---- 2) ONE fused MXU matmul for the whole clip: (Cout,K)@(K,T*L), f32
    #         accumulation, bias + ReLU, single lane-dense store. --------------
    acc = jnp.dot(w_ref[...], col_ref[...],
                  preferred_element_type=jnp.float32)   # (Cout, T*L) f32
    o_ref[...] = jnp.maximum(acc + b_ref[...], 0.0).astype(o_ref.dtype)


def conv3d_configurable_forward(x_ncdhw, w_oidhw, bias, dilation_rate):
    """Equivalent of Conv3DConfigurable.forward on PyTorch NCDHW input."""
    N, Cin, T, H, W = x_ncdhw.shape
    Cout = w_oidhw.shape[0]
    d = dilation_rate
    Tp = T + 2 * d
    Hp, Wp = H + 2, W + 2
    HpWp = Hp * Wp
    # Per-frame lane width: 128-multiple large enough that every (kh,kw) shift
    # (|off| <= Wp+1) only bleeds into zero-pad lanes of adjacent frames.
    L = _round_up(HpWp + Wp + 1, 128)
    Cinp = _round_up(Cin, 16)            # bf16 tile = 16 sublanes per tap chunk
    K = 27 * Cinp
    TOT = (Tp + 2) * L                   # one zero halo frame before and after

    # ---- boundary glue (plain JAX): no transpose, two pads + reshapes ---------
    xb = x_ncdhw.astype(jnp.bfloat16)                           # (N,Cin,T,H,W)
    x_p = jnp.pad(xb, ((0, 0), (0, Cinp - Cin),
                       (d + 1, d + 1), (1, 1), (1, 1)))         # (N,Cinp,Tp+2,Hp,Wp)
    x_flat = x_p.reshape(N, Cinp, Tp + 2, HpWp)
    x_flat = jnp.pad(x_flat, ((0, 0), (0, 0), (0, 0), (0, L - HpWp)))
    x_flat = x_flat.reshape(N, Cinp, TOT)                       # (N,Cinp,(Tp+2)*L)

    wt = jnp.transpose(w_oidhw, (0, 2, 3, 4, 1))                # (O,kt,kh,kw,I)
    wt = jnp.pad(wt, ((0, 0),) * 4 + ((0, Cinp - Cin),))        # zero pad channels
    w2 = wt.reshape(Cout, K).astype(jnp.bfloat16)               # (Cout, 27*Cinp)
    b2 = bias.reshape(Cout, 1).astype(jnp.float32)

    kernel = functools.partial(_conv3d_relu_kernel,
                               d=d, T=T, Wp=Wp, L=L, Cinp=Cinp)

    out = pl.pallas_call(
        kernel,
        out_shape=jax.ShapeDtypeStruct((N, Cout, T * L), jnp.float32),
        grid=(N,),
        in_specs=[
            # full (padded) clip for this batch element; N squeezed.
            pl.BlockSpec((None, Cinp, TOT), lambda n: (n, 0, 0)),
            # pre-flattened weights / bias, resident across the grid.
            pl.BlockSpec((Cout, K), lambda n: (0, 0)),
            pl.BlockSpec((Cout, 1), lambda n: (0, 0)),
        ],
        out_specs=pl.BlockSpec((None, Cout, T * L), lambda n: (n, 0, 0)),
        scratch_shapes=[pltpu.VMEM((K, T * L), jnp.bfloat16)],
        compiler_params=pltpu.CompilerParams(
            dimension_semantics=("parallel",)),       # N grid axis -> both TCs
    )(x_flat, w2, b2)

    # Crop the per-frame lane tail and the padded spatial ring; output is
    # already NCDHW-ordered.
    out = out.reshape(N, Cout, T, L)[:, :, :, :HpWp]
    out = out.reshape(N, Cout, T, Hp, Wp)[:, :, :, 1:H + 1, 1:W + 1]
    return out                                                  # (N,Cout,T,H,W)


if __name__ == "__main__":
    # Small shapes consistent with the module: in_filters=4, filters=8,
    # dilation_rate=2, clip of 6 frames at 8x8.
    N, Cin, T, H, W = 2, 4, 6, 8, 8
    Cout, dilation_rate = 8, 2

    key = jax.random.PRNGKey(0)
    k1, k2, k3 = jax.random.split(key, 3)
    x = jax.random.normal(k1, (N, Cin, T, H, W), jnp.float32)
    w = 0.1 * jax.random.normal(k2, (Cout, Cin, 3, 3, 3), jnp.float32)
    b = 0.1 * jax.random.normal(k3, (Cout,), jnp.float32)

    fwd = jax.jit(conv3d_configurable_forward, static_argnums=(3,))
    out = jax.block_until_ready(fwd(x, w, b, dilation_rate))

    # Reference: same bf16-rounded operands, f32-accumulated XLA conv + ReLU.
    xr = x.astype(jnp.bfloat16).astype(jnp.float32)
    wr = w.astype(jnp.bfloat16).astype(jnp.float32)
    ref = lax.conv_general_dilated(
        xr, wr, window_strides=(1, 1, 1),
        padding=[(dilation_rate, dilation_rate), (1, 1), (1, 1)],
        rhs_dilation=(dilation_rate, 1, 1),
        dimension_numbers=("NCDHW", "OIDHW", "NCDHW"),
        precision=lax.Precision.HIGHEST) + b[None, :, None, None, None]
    ref = jnp.maximum(ref, 0.0)

    np.testing.assert_allclose(np.asarray(out), np.asarray(ref),
                               atol=1e-3, rtol=1e-3)
    print("KERNEL_OK")
</pallas_src>

<mosaic_0001>
module attributes {stable_mosaic.version = 11 : i64} {
  func.func @_conv3d_relu_kernel(%arg0: i32, %arg1: memref<1x16x1536xbf16, #tpu.memory_space<vmem>>, %arg2: memref<8x432xbf16, #tpu.memory_space<vmem>>, %arg3: memref<8x1xf32, #tpu.memory_space<vmem>>, %arg4: memref<1x8x768xf32, #tpu.memory_space<vmem>>, %arg5: memref<432x768xbf16, #tpu.memory_space<vmem>>) attributes {dimension_semantics = [#tpu.dimension_semantics<parallel>], iteration_bounds = array<i64: 2>, scalar_prefetch = 0 : i64, scratch_operands = 1 : i64, tpu.core_type = #tpu.core_type<tc>, window_params = [{transform_indices = @transform_0, window_bounds = array<i64: 1, 16, 1536>}, {pipeline_mode = #tpu.pipeline_mode<synchronous>, transform_indices = @transform_1, window_bounds = array<i64: 8, 432>}, {pipeline_mode = #tpu.pipeline_mode<synchronous>, transform_indices = @transform_2, window_bounds = array<i64: 8, 1>}, {transform_indices = @transform_3, window_bounds = array<i64: 1, 8, 768>}]} {
    %c0 = arith.constant 0 : index
    %c0_0 = arith.constant 0 : index
    %c117 = arith.constant 117 : index
    %0 = vector.load %arg1[%c0, %c0_0, %c117] : memref<1x16x1536xbf16, #tpu.memory_space<vmem>>, vector<1x16x768xbf16>
    %1 = vector.shape_cast %0 : vector<1x16x768xbf16> to vector<16x768xbf16>
    %c0_1 = arith.constant 0 : index
    %c0_2 = arith.constant 0 : index
    %2 = vector.load %arg5[%c0_1, %c0_2] : memref<432x768xbf16, #tpu.memory_space<vmem>>, vector<16x768xbf16>
    tpu.vector_store %arg5[%c0_1, %c0_2], %1 {strides = array<i32>} : memref<432x768xbf16, #tpu.memory_space<vmem>>, vector<16x768xbf16>,
    %c0_3 = arith.constant 0 : index
    %c0_4 = arith.constant 0 : index
    %c118 = arith.constant 118 : index
    %3 = vector.load %arg1[%c0_3, %c0_4, %c118] : memref<1x16x1536xbf16, #tpu.memory_space<vmem>>, vector<1x16x768xbf16>
    %4 = vector.shape_cast %3 : vector<1x16x768xbf16> to vector<16x768xbf16>
    %c16 = arith.constant 16 : index
    %c0_5 = arith.constant 0 : index
    %5 = vector.load %arg5[%c16, %c0_5] : memref<432x768xbf16, #tpu.memory_space<vmem>>, vector<16x768xbf16>
    tpu.vector_store %arg5[%c16, %c0_5], %4 {strides = array<i32>} : memref<432x768xbf16, #tpu.memory_space<vmem>>, vector<16x768xbf16>,
    %c0_6 = arith.constant 0 : index
    %c0_7 = arith.constant 0 : index
    %c119 = arith.constant 119 : index
    %6 = vector.load %arg1[%c0_6, %c0_7, %c119] : memref<1x16x1536xbf16, #tpu.memory_space<vmem>>, vector<1x16x768xbf16>
    %7 = vector.shape_cast %6 : vector<1x16x768xbf16> to vector<16x768xbf16>
    %c32 = arith.constant 32 : index
    %c0_8 = arith.constant 0 : index
    %8 = vector.load %arg5[%c32, %c0_8] : memref<432x768xbf16, #tpu.memory_space<vmem>>, vector<16x768xbf16>
    tpu.vector_store %arg5[%c32, %c0_8], %7 {strides = array<i32>} : memref<432x768xbf16, #tpu.memory_space<vmem>>, vector<16x768xbf16>,
    %c0_9 = arith.constant 0 : index
    %c0_10 = arith.constant 0 : index
    %c127 = arith.constant 127 : index
    %9 = vector.load %arg1[%c0_9, %c0_10, %c127] : memref<1x16x1536xbf16, #tpu.memory_space<vmem>>, vector<1x16x768xbf16>
    %10 = vector.shape_cast %9 : vector<1x16x768xbf16> to vector<16x768xbf16>
    %c48 = arith.constant 48 : index
    %c0_11 = arith.constant 0 : index
    %11 = vector.load %arg5[%c48, %c0_11] : memref<432x768xbf16, #tpu.memory_space<vmem>>, vector<16x768xbf16>
    tpu.vector_store %arg5[%c48, %c0_11], %10 {strides = array<i32>} : memref<432x768xbf16, #tpu.memory_space<vmem>>, vector<16x768xbf16>,
    %c0_12 = arith.constant 0 : index
    %c0_13 = arith.constant 0 : index
    %c128 = arith.constant 128 : index
    %12 = vector.load %arg1[%c0_12, %c0_13, %c128] : memref<1x16x1536xbf16, #tpu.memory_space<vmem>>, vector<1x16x768xbf16>
    %13 = vector.shape_cast %12 : vector<1x16x768xbf16> to vector<16x768xbf16>
    %c64 = arith.constant 64 : index
    %c0_14 = arith.constant 0 : index
    %14 = vector.load %arg5[%c64, %c0_14] : memref<432x768xbf16, #tpu.memory_space<vmem>>, vector<16x768xbf16>
    tpu.vector_store %arg5[%c64, %c0_14], %13 {strides = array<i32>} : memref<432x768xbf16, #tpu.memory_space<vmem>>, vector<16x768xbf16>,
    %c0_15 = arith.constant 0 : index
    %c0_16 = arith.constant 0 : index
    %c129 = arith.constant 129 : index
    %15 = vector.load %arg1[%c0_15, %c0_16, %c129] : memref<1x16x1536xbf16, #tpu.memory_space<vmem>>, vector<1x16x768xbf16>
    %16 = vector.shape_cast %15 : vector<1x16x768xbf16> to vector<16x768xbf16>
    %c80 = arith.constant 80 : index
    %c0_17 = arith.constant 0 : index
    %17 = vector.load %arg5[%c80, %c0_17] : memref<432x768xbf16, #tpu.memory_space<vmem>>, vector<16x768xbf16>
    tpu.vector_store %arg5[%c80, %c0_17], %16 {strides = array<i32>} : memref<432x768xbf16, #tpu.memory_space<vmem>>, vector<16x768xbf16>,
    %c0_18 = arith.constant 0 : index
    %c0_19 = arith.constant 0 : index
    %c137 = arith.constant 137 : index
    %18 = vector.load %arg1[%c0_18, %c0_19, %c137] : memref<1x16x1536xbf16, #tpu.memory_space<vmem>>, vector<1x16x768xbf16>
    %19 = vector.shape_cast %18 : vector<1x16x768xbf16> to vector<16x768xbf16>
    %c96 = arith.constant 96 : index
    %c0_20 = arith.constant 0 : index
    %20 = vector.load %arg5[%c96, %c0_20] : memref<432x768xbf16, #tpu.memory_space<vmem>>, vector<16x768xbf16>
    tpu.vector_store %arg5[%c96, %c0_20], %19 {strides = array<i32>} : memref<432x768xbf16, #tpu.memory_space<vmem>>, vector<16x768xbf16>,
    %c0_21 = arith.constant 0 : index
    %c0_22 = arith.constant 0 : index
    %c138 = arith.constant 138 : index
    %21 = vector.load %arg1[%c0_21, %c0_22, %c138] : memref<1x16x1536xbf16, #tpu.memory_space<vmem>>, vector<1x16x768xbf16>
    %22 = vector.shape_cast %21 : vector<1x16x768xbf16> to vector<16x768xbf16>
    %c112 = arith.constant 112 : index
    %c0_23 = arith.constant 0 : index
    %23 = vector.load %arg5[%c112, %c0_23] : memref<432x768xbf16, #tpu.memory_space<vmem>>, vector<16x768xbf16>
    tpu.vector_store %arg5[%c112, %c0_23], %22 {strides = array<i32>} : memref<432x768xbf16, #tpu.memory_space<vmem>>, vector<16x768xbf16>,
    %c0_24 = arith.constant 0 : index
    %c0_25 = arith.constant 0 : index
    %c139 = arith.constant 139 : index
    %24 = vector.load %arg1[%c0_24, %c0_25, %c139] : memref<1x16x1536xbf16, #tpu.memory_space<vmem>>, vector<1x16x768xbf16>
    %25 = vector.shape_cast %24 : vector<1x16x768xbf16> to vector<16x768xbf16>
    %c128_26 = arith.constant 128 : index
    %c0_27 = arith.constant 0 : index
    %26 = vector.load %arg5[%c128_26, %c0_27] : memref<432x768xbf16, #tpu.memory_space<vmem>>, vector<16x768xbf16>
    tpu.vector_store %arg5[%c128_26, %c0_27], %25 {strides = array<i32>} : memref<432x768xbf16, #tpu.memory_space<vmem>>, vector<16x768xbf16>,
    %c0_28 = arith.constant 0 : index
    %c0_29 = arith.constant 0 : index
    %c373 = arith.constant 373 : index
    %27 = vector.load %arg1[%c0_28, %c0_29, %c373] : memref<1x16x1536xbf16, #tpu.memory_space<vmem>>, vector<1x16x768xbf16>
    %28 = vector.shape_cast %27 : vector<1x16x768xbf16> to vector<16x768xbf16>
    %c144 = arith.constant 144 : index
    %c0_30 = arith.constant 0 : index
    %29 = vector.load %arg5[%c144, %c0_30] : memref<432x768xbf16, #tpu.memory_space<vmem>>, vector<16x768xbf16>
    tpu.vector_store %arg5[%c144, %c0_30], %28 {strides = array<i32>} : memref<432x768xbf16, #tpu.memory_space<vmem>>, vector<16x768xbf16>,
    %c0_31 = arith.constant 0 : index
    %c0_32 = arith.constant 0 : index
    %c374 = arith.constant 374 : index
    %30 = vector.load %arg1[%c0_31, %c0_32, %c374] : memref<1x16x1536xbf16, #tpu.memory_space<vmem>>, vector<1x16x768xbf16>
    %31 = vector.shape_cast %30 : vector<1x16x768xbf16> to vector<16x768xbf16>
    %c160 = arith.constant 160 : index
    %c0_33 = arith.constant 0 : index
    %32 = vector.load %arg5[%c160, %c0_33] : memref<432x768xbf16, #tpu.memory_space<vmem>>, vector<16x768xbf16>
    tpu.vector_store %arg5[%c160, %c0_33], %31 {strides = array<i32>} : memref<432x768xbf16, #tpu.memory_space<vmem>>, vector<16x768xbf16>,
    %c0_34 = arith.constant 0 : index
    %c0_35 = arith.constant 0 : index
    %c375 = arith.constant 375 : index
    %33 = vector.load %arg1[%c0_34, %c0_35, %c375] : memref<1x16x1536xbf16, #tpu.memory_space<vmem>>, vector<1x16x768xbf16>
    %34 = vector.shape_cast %33 : vector<1x16x768xbf16> to vector<16x768xbf16>
    %c176 = arith.constant 176 : index
    %c0_36 = arith.constant 0 : index
    %35 = vector.load %arg5[%c176, %c0_36] : memref<432x768xbf16, #tpu.memory_space<vmem>>, vector<16x768xbf16>
    tpu.vector_store %arg5[%c176, %c0_36], %34 {strides = array<i32>} : memref<432x768xbf16, #tpu.memory_space<vmem>>, vector<16x768xbf16>,
    %c0_37 = arith.constant 0 : index
    %c0_38 = arith.constant 0 : index
    %c383 = arith.constant 383 : index
    %36 = vector.load %arg1[%c0_37, %c0_38, %c383] : memref<1x16x1536xbf16, #tpu.memory_space<vmem>>, vector<1x16x768xbf16>
    %37 = vector.shape_cast %36 : vector<1x16x768xbf16> to vector<16x768xbf16>
    %c192 = arith.constant 192 : index
    %c0_39 = arith.constant 0 : index
    %38 = vector.load %arg5[%c192, %c0_39] : memref<432x768xbf16, #tpu.memory_space<vmem>>, vector<16x768xbf16>
    tpu.vector_store %arg5[%c192, %c0_39], %37 {strides = array<i32>} : memref<432x768xbf16, #tpu.memory_space<vmem>>, vector<16x768xbf16>,
    %c0_40 = arith.constant 0 : index
    %c0_41 = arith.constant 0 : index
    %c384 = arith.constant 384 : index
    %39 = vector.load %arg1[%c0_40, %c0_41, %c384] : memref<1x16x1536xbf16, #tpu.memory_space<vmem>>, vector<1x16x768xbf16>
    %40 = vector.shape_cast %39 : vector<1x16x768xbf16> to vector<16x768xbf16>
    %c208 = arith.constant 208 : index
    %c0_42 = arith.constant 0 : index
    %41 = vector.load %arg5[%c208, %c0_42] : memref<432x768xbf16, #tpu.memory_space<vmem>>, vector<16x768xbf16>
    tpu.vector_store %arg5[%c208, %c0_42], %40 {strides = array<i32>} : memref<432x768xbf16, #tpu.memory_space<vmem>>, vector<16x768xbf16>,
    %c0_43 = arith.constant 0 : index
    %c0_44 = arith.constant 0 : index
    %c385 = arith.constant 385 : index
    %42 = vector.load %arg1[%c0_43, %c0_44, %c385] : memref<1x16x1536xbf16, #tpu.memory_space<vmem>>, vector<1x16x768xbf16>
    %43 = vector.shape_cast %42 : vector<1x16x768xbf16> to vector<16x768xbf16>
    %c224 = arith.constant 224 : index
    %c0_45 = arith.constant 0 : index
    %44 = vector.load %arg5[%c224, %c0_45] : memref<432x768xbf16, #tpu.memory_space<vmem>>, vector<16x768xbf16>
    tpu.vector_store %arg5[%c224, %c0_45], %43 {strides = array<i32>} : memref<432x768xbf16, #tpu.memory_space<vmem>>, vector<16x768xbf16>,
    %c0_46 = arith.constant 0 : index
    %c0_47 = arith.constant 0 : index
    %c393 = arith.constant 393 : index
    %45 = vector.load %arg1[%c0_46, %c0_47, %c393] : memref<1x16x1536xbf16, #tpu.memory_space<vmem>>, vector<1x16x768xbf16>
    %46 = vector.shape_cast %45 : vector<1x16x768xbf16> to vector<16x768xbf16>
    %c240 = arith.constant 240 : index
    %c0_48 = arith.constant 0 : index
    %47 = vector.load %arg5[%c240, %c0_48] : memref<432x768xbf16, #tpu.memory_space<vmem>>, vector<16x768xbf16>
    tpu.vector_store %arg5[%c240, %c0_48], %46 {strides = array<i32>} : memref<432x768xbf16, #tpu.memory_space<vmem>>, vector<16x768xbf16>,
    %c0_49 = arith.constant 0 : index
    %c0_50 = arith.constant 0 : index
    %c394 = arith.constant 394 : index
    %48 = vector.load %arg1[%c0_49, %c0_50, %c394] : memref<1x16x1536xbf16, #tpu.memory_space<vmem>>, vector<1x16x768xbf16>
    %49 = vector.shape_cast %48 : vector<1x16x768xbf16> to vector<16x768xbf16>
    %c256 = arith.constant 256 : index
    %c0_51 = arith.constant 0 : index
    %50 = vector.load %arg5[%c256, %c0_51] : memref<432x768xbf16, #tpu.memory_space<vmem>>, vector<16x768xbf16>
    tpu.vector_store %arg5[%c256, %c0_51], %49 {strides = array<i32>} : memref<432x768xbf16, #tpu.memory_space<vmem>>, vector<16x768xbf16>,
    %c0_52 = arith.constant 0 : index
    %c0_53 = arith.constant 0 : index
    %c395 = arith.constant 395 : index
    %51 = vector.load %arg1[%c0_52, %c0_53, %c395] : memref<1x16x1536xbf16, #tpu.memory_space<vmem>>, vector<1x16x768xbf16>
    %52 = vector.shape_cast %51 : vector<1x16x768xbf16> to vector<16x768xbf16>
    %c272 = arith.constant 272 : index
    %c0_54 = arith.constant 0 : index
    %53 = vector.load %arg5[%c272, %c0_54] : memref<432x768xbf16, #tpu.memory_space<vmem>>, vector<16x768xbf16>
    tpu.vector_store %arg5[%c272, %c0_54], %52 {strides = array<i32>} : memref<432x768xbf16, #tpu.memory_space<vmem>>, vector<16x768xbf16>,
    %c0_55 = arith.constant 0 : index
    %c0_56 = arith.constant 0 : index
    %c629 = arith.constant 629 : index
    %54 = vector.load %arg1[%c0_55, %c0_56, %c629] : memref<1x16x1536xbf16, #tpu.memory_space<vmem>>, vector<1x16x768xbf16>
    %55 = vector.shape_cast %54 : vector<1x16x768xbf16> to vector<16x768xbf16>
    %c288 = arith.constant 288 : index
    %c0_57 = arith.constant 0 : index
    %56 = vector.load %arg5[%c288, %c0_57] : memref<432x768xbf16, #tpu.memory_space<vmem>>, vector<16x768xbf16>
    tpu.vector_store %arg5[%c288, %c0_57], %55 {strides = array<i32>} : memref<432x768xbf16, #tpu.memory_space<vmem>>, vector<16x768xbf16>,
    %c0_58 = arith.constant 0 : index
    %c0_59 = arith.constant 0 : index
    %c630 = arith.constant 630 : index
    %57 = vector.load %arg1[%c0_58, %c0_59, %c630] : memref<1x16x1536xbf16, #tpu.memory_space<vmem>>, vector<1x16x768xbf16>
    %58 = vector.shape_cast %57 : vector<1x16x768xbf16> to vector<16x768xbf16>
    %c304 = arith.constant 304 : index
    %c0_60 = arith.constant 0 : index
    %59 = vector.load %arg5[%c304, %c0_60] : memref<432x768xbf16, #tpu.memory_space<vmem>>, vector<16x768xbf16>
    tpu.vector_store %arg5[%c304, %c0_60], %58 {strides = array<i32>} : memref<432x768xbf16, #tpu.memory_space<vmem>>, vector<16x768xbf16>,
    %c0_61 = arith.constant 0 : index
    %c0_62 = arith.constant 0 : index
    %c631 = arith.constant 631 : index
    %60 = vector.load %arg1[%c0_61, %c0_62, %c631] : memref<1x16x1536xbf16, #tpu.memory_space<vmem>>, vector<1x16x768xbf16>
    %61 = vector.shape_cast %60 : vector<1x16x768xbf16> to vector<16x768xbf16>
    %c320 = arith.constant 320 : index
    %c0_63 = arith.constant 0 : index
    %62 = vector.load %arg5[%c320, %c0_63] : memref<432x768xbf16, #tpu.memory_space<vmem>>, vector<16x768xbf16>
    tpu.vector_store %arg5[%c320, %c0_63], %61 {strides = array<i32>} : memref<432x768xbf16, #tpu.memory_space<vmem>>, vector<16x768xbf16>,
    %c0_64 = arith.constant 0 : index
    %c0_65 = arith.constant 0 : index
    %c639 = arith.constant 639 : index
    %63 = vector.load %arg1[%c0_64, %c0_65, %c639] : memref<1x16x1536xbf16, #tpu.memory_space<vmem>>, vector<1x16x768xbf16>
    %64 = vector.shape_cast %63 : vector<1x16x768xbf16> to vector<16x768xbf16>
    %c336 = arith.constant 336 : index
    %c0_66 = arith.constant 0 : index
    %65 = vector.load %arg5[%c336, %c0_66] : memref<432x768xbf16, #tpu.memory_space<vmem>>, vector<16x768xbf16>
    tpu.vector_store %arg5[%c336, %c0_66], %64 {strides = array<i32>} : memref<432x768xbf16, #tpu.memory_space<vmem>>, vector<16x768xbf16>,
    %c0_67 = arith.constant 0 : index
    %c0_68 = arith.constant 0 : index
    %c640 = arith.constant 640 : index
    %66 = vector.load %arg1[%c0_67, %c0_68, %c640] : memref<1x16x1536xbf16, #tpu.memory_space<vmem>>, vector<1x16x768xbf16>
    %67 = vector.shape_cast %66 : vector<1x16x768xbf16> to vector<16x768xbf16>
    %c352 = arith.constant 352 : index
    %c0_69 = arith.constant 0 : index
    %68 = vector.load %arg5[%c352, %c0_69] : memref<432x768xbf16, #tpu.memory_space<vmem>>, vector<16x768xbf16>
    tpu.vector_store %arg5[%c352, %c0_69], %67 {strides = array<i32>} : memref<432x768xbf16, #tpu.memory_space<vmem>>, vector<16x768xbf16>,
    %c0_70 = arith.constant 0 : index
    %c0_71 = arith.constant 0 : index
    %c641 = arith.constant 641 : index
    %69 = vector.load %arg1[%c0_70, %c0_71, %c641] : memref<1x16x1536xbf16, #tpu.memory_space<vmem>>, vector<1x16x768xbf16>
    %70 = vector.shape_cast %69 : vector<1x16x768xbf16> to vector<16x768xbf16>
    %c368 = arith.constant 368 : index
    %c0_72 = arith.constant 0 : index
    %71 = vector.load %arg5[%c368, %c0_72] : memref<432x768xbf16, #tpu.memory_space<vmem>>, vector<16x768xbf16>
    tpu.vector_store %arg5[%c368, %c0_72], %70 {strides = array<i32>} : memref<432x768xbf16, #tpu.memory_space<vmem>>, vector<16x768xbf16>,
    %c0_73 = arith.constant 0 : index
    %c0_74 = arith.constant 0 : index
    %c649 = arith.constant 649 : index
    %72 = vector.load %arg1[%c0_73, %c0_74, %c649] : memref<1x16x1536xbf16, #tpu.memory_space<vmem>>, vector<1x16x768xbf16>
    %73 = vector.shape_cast %72 : vector<1x16x768xbf16> to vector<16x768xbf16>
    %c384_75 = arith.constant 384 : index
    %c0_76 = arith.constant 0 : index
    %74 = vector.load %arg5[%c384_75, %c0_76] : memref<432x768xbf16, #tpu.memory_space<vmem>>, vector<16x768xbf16>
    tpu.vector_store %arg5[%c384_75, %c0_76], %73 {strides = array<i32>} : memref<432x768xbf16, #tpu.memory_space<vmem>>, vector<16x768xbf16>,
    %c0_77 = arith.constant 0 : index
    %c0_78 = arith.constant 0 : index
    %c650 = arith.constant 650 : index
    %75 = vector.load %arg1[%c0_77, %c0_78, %c650] : memref<1x16x1536xbf16, #tpu.memory_space<vmem>>, vector<1x16x768xbf16>
    %76 = vector.shape_cast %75 : vector<1x16x768xbf16> to vector<16x768xbf16>
    %c400 = arith.constant 400 : index
    %c0_79 = arith.constant 0 : index
    %77 = vector.load %arg5[%c400, %c0_79] : memref<432x768xbf16, #tpu.memory_space<vmem>>, vector<16x768xbf16>
    tpu.vector_store %arg5[%c400, %c0_79], %76 {strides = array<i32>} : memref<432x768xbf16, #tpu.memory_space<vmem>>, vector<16x768xbf16>,
    %c0_80 = arith.constant 0 : index
    %c0_81 = arith.constant 0 : index
    %c651 = arith.constant 651 : index
    %78 = vector.load %arg1[%c0_80, %c0_81, %c651] : memref<1x16x1536xbf16, #tpu.memory_space<vmem>>, vector<1x16x768xbf16>
    %79 = vector.shape_cast %78 : vector<1x16x768xbf16> to vector<16x768xbf16>
    %c416 = arith.constant 416 : index
    %c0_82 = arith.constant 0 : index
    %80 = vector.load %arg5[%c416, %c0_82] : memref<432x768xbf16, #tpu.memory_space<vmem>>, vector<16x768xbf16>
    tpu.vector_store %arg5[%c416, %c0_82], %79 {strides = array<i32>} : memref<432x768xbf16, #tpu.memory_space<vmem>>, vector<16x768xbf16>,
    %c0_83 = arith.constant 0 : index
    %c0_84 = arith.constant 0 : index
    %81 = vector.load %arg2[%c0_83, %c0_84] : memref<8x432xbf16, #tpu.memory_space<vmem>>, vector<8x432xbf16>
    %c0_85 = arith.constant 0 : index
    %c0_86 = arith.constant 0 : index
    %82 = vector.load %arg5[%c0_85, %c0_86] : memref<432x768xbf16, #tpu.memory_space<vmem>>, vector<432x768xbf16>
    %cst = arith.constant dense<0.000000e+00> : vector<8x768xf32>
    %83 = tpu.matmul %81, %82, %cst {dimension_numbers = #tpu.dot_dimension_numbers<[1], [0], [0], [1], [0, 0, 1, 1], [], []>} : vector<8x432xbf16>, vector<432x768xbf16>, vector<8x768xf32> -> vector<8x768xf32>
    %c0_87 = arith.constant 0 : index
    %c0_88 = arith.constant 0 : index
    %84 = vector.load %arg3[%c0_87, %c0_88] : memref<8x1xf32, #tpu.memory_space<vmem>>, vector<8x1xf32>
    %85 = vector.broadcast %84 : vector<8x1xf32> to vector<8x768xf32>
    %86 = arith.addf %83, %85 : vector<8x768xf32>
    %cst_89 = arith.constant 0.000000e+00 : f32
    %87 = vector.broadcast %cst_89 : f32 to vector<8x768xf32>
    %88 = arith.maximumf %86, %87 : vector<8x768xf32>
    %c0_90 = arith.constant 0 : index
    %c0_91 = arith.constant 0 : index
    %c0_92 = arith.constant 0 : index
    %89 = vector.load %arg4[%c0_90, %c0_91, %c0_92] : memref<1x8x768xf32, #tpu.memory_space<vmem>>, vector<1x8x768xf32>
    %90 = vector.shape_cast %89 : vector<1x8x768xf32> to vector<8x768xf32>
    %91 = vector.shape_cast %88 : vector<8x768xf32> to vector<1x8x768xf32>
    tpu.vector_store %arg4[%c0_90, %c0_91, %c0_92], %91 {strides = array<i32>} : memref<1x8x768xf32, #tpu.memory_space<vmem>>, vector<1x8x768xf32>,
    return
  }
  func.func @transform_0(%arg0: i32) -> (i32, i32, i32) {
    %c0_i32 = arith.constant 0 : i32
    %c0_i32_0 = arith.constant 0 : i32
    %c0_i32_1 = arith.constant 0 : i32
    return %arg0, %c0_i32, %c0_i32_0 : i32, i32, i32
  }
  func.func @transform_1(%arg0: i32) -> (i32, i32) {
    %c0_i32 = arith.constant 0 : i32
    %c0_i32_0 = arith.constant 0 : i32
    %c0_i32_1 = arith.constant 0 : i32
    return %c0_i32, %c0_i32_0 : i32, i32
  }
  func.func @transform_2(%arg0: i32) -> (i32, i32) {
    %c0_i32 = arith.constant 0 : i32
    %c0_i32_0 = arith.constant 0 : i32
    %c0_i32_1 = arith.constant 0 : i32
    return %c0_i32, %c0_i32_0 : i32, i32
  }
  func.func @transform_3(%arg0: i32) -> (i32, i32, i32) {
    %c0_i32 = arith.constant 0 : i32
    %c0_i32_0 = arith.constant 0 : i32
    %c0_i32_1 = arith.constant 0 : i32
    return %arg0, %c0_i32, %c0_i32_0 : i32, i32, i32
  }
}

</mosaic_0001>

<llo_original>
// kernel: conv3d_configurable_forward.1
$region0: #{conv3d_configurable_forward.1}
  #allocation0 [shape = 'u32[]', space=smem, size = 0x4, offset = 0x4, fixed_abs, tag = 'smem constant byte address 0x4 - core index']
  #allocation1 [shape = 'u32[144,128]{1,0:T(1,128)}', space=vmem, size = 0x12000, scoped, tag = 'internal scratch']
  #allocation2 [shape = 'bf16[432,768]{1,0:T(8,128)(2,1)}', space=vmem, size = 0xa2000, scoped, tag = 'scratch operand']
  %s0 = inlined_call_operand.vmem [shape: bf16[2,16,1536], index: 0, kind: input, shape index: {}]
  %s1 = inlined_call_operand.vmem [shape: bf16[8,432], index: 1, kind: input, shape index: {}]
  %s2 = inlined_call_operand.vmem [shape: f32[8,1], index: 2, kind: input, shape index: {}]
  %s3 = inlined_call_operand.vmem [shape: f32[2,8,768], index: 3, kind: output, shape index: {}]
  %s4 = sld [smem:[#allocation0]]
  $region45: #{conv3d_configurable_forward.1} parent=0
    _
  %s6 = ssub.s32 1, %s4
  %s7 = scalar_select 0, %s6, %s4
  loop: start=0, step=1, limit=4
  $region2: #{conv3d_configurable_forward.1} parent=0 // loop_pre_header
    _
  $region3: #{conv3d_configurable_forward.1} parent=0 // loop_header
    %s9 = sphi 0, %s13
    %p10 = scmp.ge.s32.totalorder %s9, 4
    %s19 = sphi 0, %s21
    %s22 = sphi 0, %s19
    %s23 = sphi 0, %s22
    %s39 = sphi 0, %s23
    %s43 = sphi 0, %s43
    %s45 = sphi 0, %s43
    %s46 = sphi 0, %s45
    %s60 = sphi 0, %s46
    %s64 = sphi 0, %s64
    %s66 = sphi 0, %s64
    %s67 = sphi 0, %s66
    %s81 = sphi 0, %s67
    %s87 = sphi 0, %s89
    %s90 = sphi 0, %s87
    %s91 = sphi 0, %s90
    %s107 = sphi 0, %s91
  $region4: #{conv3d_configurable_forward.1} parent=0 // loop_header_branch
    %12 = sbr.rel (%p10) target = $region8
  $region5: #{conv3d_configurable_forward.1} parent=0 // loop_body
    %s14 = ssub.s32 %s9, 1
    %s15 = ssub.s32 %s9, 2
    %s16 = sadd.s32 %s9, 1
    %s17 = ssub.s32 %s9, %s16
    %p18 = scmp.eq.s32.totalorder %s17, 0
    %s20 = sadd.s32 %s19, 1
    %s21 = scalar_select %p18, %s19, %s20
    %p24 = pneg %p18
    %p25 = scmp.eq.s32.totalorder %s9, 1
    %p26 = por %p24, %p25
    %p27 = scmp.ne.s32.totalorder %s19, %s22
    %p28 = scmp.eq.s32.totalorder %s9, 0
    %p29 = por %p27, %p28
    %p30 = scmp.ne.s32.totalorder %s19, %s22
    %p31 = scmp.eq.s32.totalorder %s14, 1
    %p32 = por %p30, %p31
    %p33 = scmp.ne.s32.totalorder %s22, %s23
    %p34 = scmp.eq.s32.totalorder %s14, 0
    %p35 = por %p33, %p34
    %p36 = scmp.ne.s32.totalorder %s22, %s23
    %p37 = scmp.eq.s32.totalorder %s15, 1
    %p38 = por %p36, %p37
    %p40 = scmp.ne.s32.totalorder %s23, %s39
    %p41 = scmp.eq.s32.totalorder %s15, 0
    %p42 = por %p40, %p41
    %s44 = sadd.s32 %s43, 1
    %p47 = scmp.eq.s32.totalorder %s9, 1
    %p48 = scmp.ne.s32.totalorder %s43, %s45
    %p49 = scmp.eq.s32.totalorder %s9, 0
    %p50 = por %p48, %p49
    %p51 = scmp.ne.s32.totalorder %s43, %s45
    %p52 = scmp.eq.s32.totalorder %s14, 1
    %p53 = por %p51, %p52
    %p54 = scmp.ne.s32.totalorder %s45, %s46
    %p55 = scmp.eq.s32.totalorder %s14, 0
    %p56 = por %p54, %p55
    %p57 = scmp.ne.s32.totalorder %s45, %s46
    %p58 = scmp.eq.s32.totalorder %s15, 1
    %p59 = por %p57, %p58
    %p61 = scmp.ne.s32.totalorder %s46, %s60
    %p62 = scmp.eq.s32.totalorder %s15, 0
    %p63 = por %p61, %p62
    %s65 = sadd.s32 %s64, 1
    %p68 = scmp.eq.s32.totalorder %s9, 1
    %p69 = scmp.ne.s32.totalorder %s64, %s66
    %p70 = scmp.eq.s32.totalorder %s9, 0
    %p71 = por %p69, %p70
    %p72 = scmp.ne.s32.totalorder %s64, %s66
    %p73 = scmp.eq.s32.totalorder %s14, 1
    %p74 = por %p72, %p73
    %p75 = scmp.ne.s32.totalorder %s66, %s67
    %p76 = scmp.eq.s32.totalorder %s14, 0
    %p77 = por %p75, %p76
    %p78 = scmp.ne.s32.totalorder %s66, %s67
    %p79 = scmp.eq.s32.totalorder %s15, 1
    %p80 = por %p78, %p79
    %p82 = scmp.ne.s32.totalorder %s67, %s81
    %p83 = scmp.eq.s32.totalorder %s15, 0
    %p84 = por %p82, %p83
    %s85 = ssub.s32 %s9, %s16
    %p86 = scmp.eq.s32.totalorder %s85, 0
    %s88 = sadd.s32 %s87, 1
    %s89 = scalar_select %p86, %s87, %s88
    %p92 = pneg %p86
    %p93 = scmp.eq.s32.totalorder %s9, 1
    %p94 = por %p92, %p93
    %p95 = scmp.ne.s32.totalorder %s87, %s90
    %p96 = scmp.eq.s32.totalorder %s9, 0
    %p97 = por %p95, %p96
    %p98 = scmp.ne.s32.totalorder %s87, %s90
    %p99 = scmp.eq.s32.totalorder %s14, 1
    %p100 = por %p98, %p99
    %p101 = scmp.ne.s32.totalorder %s90, %s91
    %p102 = scmp.eq.s32.totalorder %s14, 0
    %p103 = por %p101, %p102
    %p104 = scmp.ne.s32.totalorder %s90, %s91
    %p105 = scmp.eq.s32.totalorder %s15, 1
    %p106 = por %p104, %p105
    %p108 = scmp.ne.s32.totalorder %s91, %s107
    %p109 = scmp.eq.s32.totalorder %s15, 0
    %p110 = por %p108, %p109
    %p111 = scmp.le.s32.totalorder 1, %s9
    %p112 = scmp.lt.s32.totalorder %s9, 3
    %p113 = pnand %p111, %p112
    %p114 = pneg %p113
    // Predicated region
    $region9: #{conv3d_configurable_forward.1} parent=5 // pred_check
      _
    $region10: #{conv3d_configurable_forward.1} parent=5 // pred_check_branch
      %116 = sbr.rel (%p113) target = $region12
    $region11: #{conv3d_configurable_forward.1} parent=5 // pred_region
      %s117 = ssub.s32 %s9, 1
      // Predicated region
      $region13: #{conv3d_configurable_forward.1} parent=11 // pred_check
        %p118 = pneg %p56
      $region14: #{conv3d_configurable_forward.1} parent=11 // pred_check_branch
        %120 = sbr.rel (%p118) target = $region16
      $region15: #{conv3d_configurable_forward.1} parent=11 // pred_region
        _
      $region16: #{conv3d_configurable_forward.1} parent=11 // pred_fallthru
        _
      // Predicated region
      $region17: #{conv3d_configurable_forward.1} parent=11 // pred_check
        %p121 = pneg %p77
      $region18: #{conv3d_configurable_forward.1} parent=11 // pred_check_branch
        %123 = sbr.rel (%p121) target = $region20
      $region19: #{conv3d_configurable_forward.1} parent=11 // pred_region
        _
      $region20: #{conv3d_configurable_forward.1} parent=11 // pred_fallthru
        _
    $region12: #{conv3d_configurable_forward.1} parent=5 // pred_fallthru
      _
    %p124 = scmp.lt.s32.totalorder %s9, 2
    // Predicated region
    $region21: #{conv3d_configurable_forward.1} parent=5 // pred_check
      %p125 = pneg %p124
    $region22: #{conv3d_configurable_forward.1} parent=5 // pred_check_branch
      %127 = sbr.rel (%p125) target = $region24
    $region23: #{conv3d_configurable_forward.1} parent=5 // pred_region
      // Predicated region
      $region25: #{conv3d_configurable_forward.1} parent=23 // pred_check
        %p128 = pneg %p29
      $region26: #{conv3d_configurable_forward.1} parent=23 // pred_check_branch
        %130 = sbr.rel (%p128) target = $region28
      $region27: #{conv3d_configurable_forward.1} parent=23 // pred_region
        %p131 = scmp.lt.s32.totalorder %s9, 1
        %s132 = scalar_select %p131, %s9, 1
        %s133 = smul.addr %s132, 24
        %s134 = smul.addr %s133, 4
        %s135 = scalar_lea.vmem %s0, %s134
      $region28: #{conv3d_configurable_forward.1} parent=23 // pred_fallthru
        _
    $region24: #{conv3d_configurable_forward.1} parent=5 // pred_fallthru
      _
    %p136 = scmp.le.s32.totalorder 1, %s9
    %p137 = scmp.lt.s32.totalorder %s9, 3
    %p138 = pnand %p136, %p137
    %p139 = pneg %p138
    // Predicated region
    $region29: #{conv3d_configurable_forward.1} parent=5 // pred_check
      _
    $region30: #{conv3d_configurable_forward.1} parent=5 // pred_check_branch
      %141 = sbr.rel (%p138) target = $region32
    $region31: #{conv3d_configurable_forward.1} parent=5 // pred_region
      %s142 = ssub.s32 %s9, 1
      %p143 = scmp.lt.s32.totalorder %s14, 1
      %s144 = scalar_select %p143, %s14, 1
      %s145 = smul.addr %s144, 24
      %s146 = smul.addr %s145, 4
      %s147 = scalar_lea.vmem %s0, %s146
      %p148 = pneg %p35
      %p149 = pneg %p32
      %p150 = pneg %p56
      %p151 = pneg %p53
      %p152 = pneg %p77
      %p153 = pneg %p74
      %p154 = pneg %p103
      %p155 = pneg %p100
      %p156 = scmp.lt.s32.totalorder %s14, 1
      %s157 = scalar_select %p156, %s14, 1
      %s158 = smul.addr %s157, 6
      %s159 = smul.addr %s158, 8
      %s160 = scalar_lea.vmem %s3, %s159
      %p161 = scmp.lt.s32.totalorder %s14, 1
      %s162 = scalar_select %p161, %s14, 1
      %s163 = smul.addr %s162, 24
      %s164 = smul.addr %s163, 4
      %s165 = scalar_lea.vmem %s0, %s164
      %p166 = scmp.lt.s32.totalorder %s14, 1
      %s167 = scalar_select %p166, %s14, 1
      %s168 = smul.addr %s167, 6
      %s169 = smul.addr %s168, 8
      %s170 = scalar_lea.vmem %s3, %s169
      %v172 = vld [vmem:[%s165] sm:$0xff]
      %v173 = vld [vmem:[%s165 + $0x8] sm:$0xff]
      %v174 = vld [vmem:[%s165 + $0x10] sm:$0xff]
      %v175 = vld [vmem:[%s165 + $0x18] sm:$0xf]
      %v176 = vld [vmem:[%s165 + $0x30] sm:$0xff]
      %v177 = vld [vmem:[%s165 + $0x38] sm:$0xff]
      %v178 = vld [vmem:[%s165 + $0x40] sm:$0xff]
      %v179 = vld [vmem:[%s165 + $0x48] sm:$0xf]
      %188 = vrot.lane.b32.xlu0 %v172, 11
      %v189 = vpop.permute.xlu0 %188
      %190 = vrot.lane.b32.xlu0 %v173, 11
      %v191 = vpop.permute.xlu0 %190
      %192 = vrot.lane.b32.xlu0 %v174, 11
      %v193 = vpop.permute.xlu0 %192
      %194 = vrot.lane.b32.xlu0 %v175, 11
      %v195 = vpop.permute.xlu0 %194
      %196 = vrot.lane.b32.xlu0 %v176, 11
      %v197 = vpop.permute.xlu0 %196
      %198 = vrot.lane.b32.xlu0 %v177, 11
      %v199 = vpop.permute.xlu0 %198
      %200 = vrot.lane.b32.xlu0 %v178, 11
      %v201 = vpop.permute.xlu0 %200
      %202 = vrot.lane.b32.xlu0 %v179, 11
      %v203 = vpop.permute.xlu0 %202
      %v204 = vrot.slane %v189, 4
      %v205 = vrot.slane %v191, 4
      %v206 = vrot.slane %v193, 4
      %v207 = vrot.slane %v195, 4
      %v208 = vrot.slane %v197, 4
      %v209 = vrot.slane %v199, 4
      %v210 = vrot.slane %v201, 4
      %v211 = vrot.slane %v203, 4
      %vm212 = vcmask 1043456
      %v213 = vsel %vm212, %v204, %v205
      %vm214 = vcmask 89088
      %v215 = vsel %vm214, %v189, %v213
      %v216 = vsel %vm212, %v205, %v206
      %v217 = vsel %vm214, %v191, %v216
      %v218 = vsel %vm212, %v206, %v207
      %v219 = vsel %vm214, %v193, %v218
      %v220 = vsel %vm212, %v208, %v209
      %v221 = vsel %vm214, %v197, %v220
      %v222 = vsel %vm212, %v209, %v210
      %v223 = vsel %vm214, %v199, %v222
      %v224 = vsel %vm212, %v210, %v211
      %v225 = vsel %vm214, %v201, %v224
      %232 = vst [vmem:[#allocation2] sm:$0xff] %v215
      %233 = vst [vmem:[#allocation2 + $0x8] sm:$0xff] %v217
      %234 = vst [vmem:[#allocation2 + $0x10] sm:$0xff] %v219
      %235 = vst [vmem:[#allocation2 + $0x18] sm:$0xff] %v221
      %236 = vst [vmem:[#allocation2 + $0x20] sm:$0xff] %v223
      %237 = vst [vmem:[#allocation2 + $0x28] sm:$0xff] %v225
      %v238 = vld [vmem:[%s165] sm:$0xff]
      %v239 = vld [vmem:[%s165 + $0x8] sm:$0xff]
      %v240 = vld [vmem:[%s165 + $0x10] sm:$0xff]
      %v241 = vld [vmem:[%s165 + $0x18] sm:$0xf]
      %v242 = vld [vmem:[%s165 + $0x30] sm:$0xff]
      %v243 = vld [vmem:[%s165 + $0x38] sm:$0xff]
      %v244 = vld [vmem:[%s165 + $0x40] sm:$0xff]
      %v245 = vld [vmem:[%s165 + $0x48] sm:$0xf]
      %254 = vrot.lane.b32.xlu0 %v238, 10
      %v255 = vpop.permute.xlu0 %254
      %256 = vrot.lane.b32.xlu0 %v239, 10
      %v257 = vpop.permute.xlu0 %256
      %258 = vrot.lane.b32.xlu0 %v240, 10
      %v259 = vpop.permute.xlu0 %258
      %260 = vrot.lane.b32.xlu0 %v241, 10
      %v261 = vpop.permute.xlu0 %260
      %262 = vrot.lane.b32.xlu0 %v242, 10
      %v263 = vpop.permute.xlu0 %262
      %264 = vrot.lane.b32.xlu0 %v243, 10
      %v265 = vpop.permute.xlu0 %264
      %266 = vrot.lane.b32.xlu0 %v244, 10
      %v267 = vpop.permute.xlu0 %266
      %268 = vrot.lane.b32.xlu0 %v245, 10
      %v269 = vpop.permute.xlu0 %268
      %v270 = vrot.slane %v255, 4
      %v271 = vrot.slane %v257, 4
      %v272 = vrot.slane %v259, 4
      %v273 = vrot.slane %v261, 4
      %v274 = vrot.slane %v263, 4
      %v275 = vrot.slane %v265, 4
      %v276 = vrot.slane %v267, 4
      %v277 = vrot.slane %v269, 4
      %v278 = vsel %vm212, %v270, %v271
      %vm279 = vcmask 80896
      %v280 = vsel %vm279, %v255, %v278
      %v281 = vsel %vm212, %v271, %v272
      %v282 = vsel %vm279, %v257, %v281
      %v283 = vsel %vm212, %v272, %v273
      %v284 = vsel %vm279, %v259, %v283
      %v285 = vsel %vm212, %v274, %v275
      %v286 = vsel %vm279, %v263, %v285
      %v287 = vsel %vm212, %v275, %v276
      %v288 = vsel %vm279, %v265, %v287
      %v289 = vsel %vm212, %v276, %v277
      %v290 = vsel %vm279, %v267, %v289
      %297 = vst [vmem:[#allocation2 + $0x30] sm:$0xff] %v280
      %298 = vst [vmem:[#allocation2 + $0x38] sm:$0xff] %v282
      %299 = vst [vmem:[#allocation2 + $0x40] sm:$0xff] %v284
      %300 = vst [vmem:[#allocation2 + $0x48] sm:$0xff] %v286
      %301 = vst [vmem:[#allocation2 + $0x50] sm:$0xff] %v288
      %302 = vst [vmem:[#allocation2 + $0x58] sm:$0xff] %v290
      %v303 = vld [vmem:[%s165] sm:$0xff]
      %v304 = vld [vmem:[%s165 + $0x8] sm:$0xff]
      %v305 = vld [vmem:[%s165 + $0x10] sm:$0xff]
      %v306 = vld [vmem:[%s165 + $0x18] sm:$0xf]
      %v307 = vld [vmem:[%s165 + $0x30] sm:$0xff]
      %v308 = vld [vmem:[%s165 + $0x38] sm:$0xff]
      %v309 = vld [vmem:[%s165 + $0x40] sm:$0xff]
      %v310 = vld [vmem:[%s165 + $0x48] sm:$0xf]
      %319 = vrot.lane.b32.xlu0 %v303, 9
      %v320 = vpop.permute.xlu0 %319
      %321 = vrot.lane.b32.xlu0 %v304, 9
      %v322 = vpop.permute.xlu0 %321
      %323 = vrot.lane.b32.xlu0 %v305, 9
      %v324 = vpop.permute.xlu0 %323
      %325 = vrot.lane.b32.xlu0 %v306, 9
      %v326 = vpop.permute.xlu0 %325
      %327 = vrot.lane.b32.xlu0 %v307, 9
      %v328 = vpop.permute.xlu0 %327
      %329 = vrot.lane.b32.xlu0 %v308, 9
      %v330 = vpop.permute.xlu0 %329
      %331 = vrot.lane.b32.xlu0 %v309, 9
      %v332 = vpop.permute.xlu0 %331
      %333 = vrot.lane.b32.xlu0 %v310, 9
      %v334 = vpop.permute.xlu0 %333
      %v335 = vrot.slane %v320, 4
      %v336 = vrot.slane %v322, 4
      %v337 = vrot.slane %v324, 4
      %v338 = vrot.slane %v326, 4
      %v339 = vrot.slane %v328, 4
      %v340 = vrot.slane %v330, 4
      %v341 = vrot.slane %v332, 4
      %v342 = vrot.slane %v334, 4
      %v343 = vsel %vm212, %v335, %v336
      %vm344 = vcmask 72704
      %v345 = vsel %vm344, %v320, %v343
      %v346 = vsel %vm212, %v336, %v337
      %v347 = vsel %vm344, %v322, %v346
      %v348 = vsel %vm212, %v337, %v338
      %v349 = vsel %vm344, %v324, %v348
      %v350 = vsel %vm212, %v339, %v340
      %v351 = vsel %vm344, %v328, %v350
      %v352 = vsel %vm212, %v340, %v341
      %v353 = vsel %vm344, %v330, %v352
      %v354 = vsel %vm212, %v341, %v342
      %v355 = vsel %vm344, %v332, %v354
      %362 = vst [vmem:[#allocation2 + $0x60] sm:$0xff] %v345
      %363 = vst [vmem:[#allocation2 + $0x68] sm:$0xff] %v347
      %364 = vst [vmem:[#allocation2 + $0x70] sm:$0xff] %v349
      %365 = vst [vmem:[#allocation2 + $0x78] sm:$0xff] %v351
      %366 = vst [vmem:[#allocation2 + $0x80] sm:$0xff] %v353
      %367 = vst [vmem:[#allocation2 + $0x88] sm:$0xff] %v355
      %v368 = vld [vmem:[%s165] sm:$0xff]
      %v369 = vld [vmem:[%s165 + $0x8] sm:$0xff]
      %v370 = vld [vmem:[%s165 + $0x10] sm:$0xff]
      %v371 = vld [vmem:[%s165 + $0x18] sm:$0xf]
      %v372 = vld [vmem:[%s165 + $0x30] sm:$0xff]
      %v373 = vld [vmem:[%s165 + $0x38] sm:$0xff]
      %v374 = vld [vmem:[%s165 + $0x40] sm:$0xff]
      %v375 = vld [vmem:[%s165 + $0x48] sm:$0xf]
      %384 = vrot.lane.b32.xlu0 %v368, 1
      %v385 = vpop.permute.xlu0 %384
      %386 = vrot.lane.b32.xlu0 %v369, 1
      %v387 = vpop.permute.xlu0 %386
      %388 = vrot.lane.b32.xlu0 %v370, 1
      %v389 = vpop.permute.xlu0 %388
      %390 = vrot.lane.b32.xlu0 %v371, 1
      %v391 = vpop.permute.xlu0 %390
      %392 = vrot.lane.b32.xlu0 %v372, 1
      %v393 = vpop.permute.xlu0 %392
      %394 = vrot.lane.b32.xlu0 %v373, 1
      %v395 = vpop.permute.xlu0 %394
      %396 = vrot.lane.b32.xlu0 %v374, 1
      %v397 = vpop.permute.xlu0 %396
      %398 = vrot.lane.b32.xlu0 %v375, 1
      %v399 = vpop.permute.xlu0 %398
      %v400 = vrot.slane %v385, 4
      %v401 = vrot.slane %v387, 4
      %v402 = vrot.slane %v389, 4
      %v403 = vrot.slane %v391, 4
      %v404 = vrot.slane %v393, 4
      %v405 = vrot.slane %v395, 4
      %v406 = vrot.slane %v397, 4
      %v407 = vrot.slane %v399, 4
      %v408 = vsel %vm212, %v400, %v401
      %vm409 = vcmask 7168
      %v410 = vsel %vm409, %v385, %v408
      %v411 = vsel %vm212, %v401, %v402
      %v412 = vsel %vm409, %v387, %v411
      %v413 = vsel %vm212, %v402, %v403
      %v414 = vsel %vm409, %v389, %v413
      %v415 = vsel %vm212, %v404, %v405
      %v416 = vsel %vm409, %v393, %v415
      %v417 = vsel %vm212, %v405, %v406
      %v418 = vsel %vm409, %v395, %v417
      %v419 = vsel %vm212, %v406, %v407
      %v420 = vsel %vm409, %v397, %v419
      %427 = vst [vmem:[#allocation2 + $0x90] sm:$0xff] %v410
      %428 = vst [vmem:[#allocation2 + $0x98] sm:$0xff] %v412
      %429 = vst [vmem:[#allocation2 + $0xa0] sm:$0xff] %v414
      %430 = vst [vmem:[#allocation2 + $0xa8] sm:$0xff] %v416
      %431 = vst [vmem:[#allocation2 + $0xb0] sm:$0xff] %v418
      %432 = vst [vmem:[#allocation2 + $0xb8] sm:$0xff] %v420
      %v433 = vld [vmem:[%s165 + $0x4] sm:$0xff]
      %v434 = vld [vmem:[%s165 + $0xc] sm:$0xff]
      %v435 = vld [vmem:[%s165 + $0x14] sm:$0xff]
      %v436 = vld [vmem:[%s165 + $0x34] sm:$0xff]
      %v437 = vld [vmem:[%s165 + $0x3c] sm:$0xff]
      %v438 = vld [vmem:[%s165 + $0x44] sm:$0xff]
      %439 = vst [vmem:[#allocation2 + $0xc0] sm:$0xff] %v433
      %440 = vst [vmem:[#allocation2 + $0xc8] sm:$0xff] %v434
      %441 = vst [vmem:[#allocation2 + $0xd0] sm:$0xff] %v435
      %442 = vst [vmem:[#allocation2 + $0xd8] sm:$0xff] %v436
      %443 = vst [vmem:[#allocation2 + $0xe0] sm:$0xff] %v437
      %444 = vst [vmem:[#allocation2 + $0xe8] sm:$0xff] %v438
      %v445 = vld [vmem:[%s165 + $0x4] sm:$0xff]
      %v446 = vld [vmem:[%s165 + $0xc] sm:$0xff]
      %v447 = vld [vmem:[%s165 + $0x14] sm:$0xff]
      %v448 = vld [vmem:[%s165 + $0x1c] sm:$0xf]
      %v449 = vld [vmem:[%s165 + $0x34] sm:$0xff]
      %v450 = vld [vmem:[%s165 + $0x3c] sm:$0xff]
      %v451 = vld [vmem:[%s165 + $0x44] sm:$0xff]
      %v452 = vld [vmem:[%s165 + $0x4c] sm:$0xf]
      %461 = vrot.lane.b32.xlu0 %v445, 127
      %v462 = vpop.permute.xlu0 %461
      %463 = vrot.lane.b32.xlu0 %v446, 127
      %v464 = vpop.permute.xlu0 %463
      %465 = vrot.lane.b32.xlu0 %v447, 127
      %v466 = vpop.permute.xlu0 %465
      %467 = vrot.lane.b32.xlu0 %v448, 127
      %v468 = vpop.permute.xlu0 %467
      %469 = vrot.lane.b32.xlu0 %v449, 127
      %v470 = vpop.permute.xlu0 %469
      %471 = vrot.lane.b32.xlu0 %v450, 127
      %v472 = vpop.permute.xlu0 %471
      %473 = vrot.lane.b32.xlu0 %v451, 127
      %v474 = vpop.permute.xlu0 %473
      %475 = vrot.lane.b32.xlu0 %v452, 127
      %v476 = vpop.permute.xlu0 %475
      %v477 = vrot.slane %v462, 4
      %v478 = vrot.slane %v464, 4
      %v479 = vrot.slane %v466, 4
      %v480 = vrot.slane %v468, 4
      %v481 = vrot.slane %v470, 4
      %v482 = vrot.slane %v472, 4
      %v483 = vrot.slane %v474, 4
      %v484 = vrot.slane %v476, 4
      %v485 = vsel %vm212, %v477, %v478
      %vm486 = vcmask 1039360
      %v487 = vsel %vm486, %v462, %v485
      %v488 = vsel %vm212, %v478, %v479
      %v489 = vsel %vm486, %v464, %v488
      %v490 = vsel %vm212, %v479, %v480
      %v491 = vsel %vm486, %v466, %v490
      %v492 = vsel %vm212, %v481, %v482
      %v493 = vsel %vm486, %v470, %v492
      %v494 = vsel %vm212, %v482, %v483
      %v495 = vsel %vm486, %v472, %v494
      %v496 = vsel %vm212, %v483, %v484
      %v497 = vsel %vm486, %v474, %v496
      %504 = vst [vmem:[#allocation2 + $0xf0] sm:$0xff] %v487
      %505 = vst [vmem:[#allocation2 + $0xf8] sm:$0xff] %v489
      %506 = vst [vmem:[#allocation2 + $0x100] sm:$0xff] %v491
      %507 = vst [vmem:[#allocation2 + $0x108] sm:$0xff] %v493
      %508 = vst [vmem:[#allocation2 + $0x110] sm:$0xff] %v495
      %509 = vst [vmem:[#allocation2 + $0x118] sm:$0xff] %v497
      %v510 = vld [vmem:[%s165 + $0x4] sm:$0xff]
      %v511 = vld [vmem:[%s165 + $0xc] sm:$0xff]
      %v512 = vld [vmem:[%s165 + $0x14] sm:$0xff]
      %v513 = vld [vmem:[%s165 + $0x1c] sm:$0xf]
      %v514 = vld [vmem:[%s165 + $0x34] sm:$0xff]
      %v515 = vld [vmem:[%s165 + $0x3c] sm:$0xff]
      %v516 = vld [vmem:[%s165 + $0x44] sm:$0xff]
      %v517 = vld [vmem:[%s165 + $0x4c] sm:$0xf]
      %526 = vrot.lane.b32.xlu0 %v510, 119
      %v527 = vpop.permute.xlu0 %526
      %528 = vrot.lane.b32.xlu0 %v511, 119
      %v529 = vpop.permute.xlu0 %528
      %530 = vrot.lane.b32.xlu0 %v512, 119
      %v531 = vpop.permute.xlu0 %530
      %532 = vrot.lane.b32.xlu0 %v513, 119
      %v533 = vpop.permute.xlu0 %532
      %534 = vrot.lane.b32.xlu0 %v514, 119
      %v535 = vpop.permute.xlu0 %534
      %536 = vrot.lane.b32.xlu0 %v515, 119
      %v537 = vpop.permute.xlu0 %536
      %538 = vrot.lane.b32.xlu0 %v516, 119
      %v539 = vpop.permute.xlu0 %538
      %540 = vrot.lane.b32.xlu0 %v517, 119
      %v541 = vpop.permute.xlu0 %540
      %v542 = vrot.slane %v527, 4
      %v543 = vrot.slane %v529, 4
      %v544 = vrot.slane %v531, 4
      %v545 = vrot.slane %v533, 4
      %v546 = vrot.slane %v535, 4
      %v547 = vrot.slane %v537, 4
      %v548 = vrot.slane %v539, 4
      %v549 = vrot.slane %v541, 4
      %v550 = vsel %vm212, %v542, %v543
      %vm551 = vcmask 973824
      %v552 = vsel %vm551, %v527, %v550
      %v553 = vsel %vm212, %v543, %v544
      %v554 = vsel %vm551, %v529, %v553
      %v555 = vsel %vm212, %v544, %v545
      %v556 = vsel %vm551, %v531, %v555
      %v557 = vsel %vm212, %v546, %v547
      %v558 = vsel %vm551, %v535, %v557
      %v559 = vsel %vm212, %v547, %v548
      %v560 = vsel %vm551, %v537, %v559
      %v561 = vsel %vm212, %v548, %v549
      %v562 = vsel %vm551, %v539, %v561
      %569 = vst [vmem:[#allocation2 + $0x120] sm:$0xff] %v552
      %570 = vst [vmem:[#allocation2 + $0x128] sm:$0xff] %v554
      %571 = vst [vmem:[#allocation2 + $0x130] sm:$0xff] %v556
      %572 = vst [vmem:[#allocation2 + $0x138] sm:$0xff] %v558
      %573 = vst [vmem:[#allocation2 + $0x140] sm:$0xff] %v560
      %574 = vst [vmem:[#allocation2 + $0x148] sm:$0xff] %v562
      %v575 = vld [vmem:[%s165 + $0x4] sm:$0xff]
      %v576 = vld [vmem:[%s165 + $0xc] sm:$0xff]
      %v577 = vld [vmem:[%s165 + $0x14] sm:$0xff]
      %v578 = vld [vmem:[%s165 + $0x1c] sm:$0xf]
      %v579 = vld [vmem:[%s165 + $0x34] sm:$0xff]
      %v580 = vld [vmem:[%s165 + $0x3c] sm:$0xff]
      %v581 = vld [vmem:[%s165 + $0x44] sm:$0xff]
      %v582 = vld [vmem:[%s165 + $0x4c] sm:$0xf]
      %591 = vrot.lane.b32.xlu0 %v575, 118
      %v592 = vpop.permute.xlu0 %591
      %593 = vrot.lane.b32.xlu0 %v576, 118
      %v594 = vpop.permute.xlu0 %593
      %595 = vrot.lane.b32.xlu0 %v577, 118
      %v596 = vpop.permute.xlu0 %595
      %597 = vrot.lane.b32.xlu0 %v578, 118
      %v598 = vpop.permute.xlu0 %597
      %599 = vrot.lane.b32.xlu0 %v579, 118
      %v600 = vpop.permute.xlu0 %599
      %601 = vrot.lane.b32.xlu0 %v580, 118
      %v602 = vpop.permute.xlu0 %601
      %603 = vrot.lane.b32.xlu0 %v581, 118
      %v604 = vpop.permute.xlu0 %603
      %605 = vrot.lane.b32.xlu0 %v582, 118
      %v606 = vpop.permute.xlu0 %605
      %v607 = vrot.slane %v592, 4
      %v608 = vrot.slane %v594, 4
      %v609 = vrot.slane %v596, 4
      %v610 = vrot.slane %v598, 4
      %v611 = vrot.slane %v600, 4
      %v612 = vrot.slane %v602, 4
      %v613 = vrot.slane %v604, 4
      %v614 = vrot.slane %v606, 4
      %v615 = vsel %vm212, %v607, %v608
      %vm616 = vcmask 965632
      %v617 = vsel %vm616, %v592, %v615
      %v618 = vsel %vm212, %v608, %v609
      %v619 = vsel %vm616, %v594, %v618
      %v620 = vsel %vm212, %v609, %v610
      %v621 = vsel %vm616, %v596, %v620
      %v622 = vsel %vm212, %v611, %v612
      %v623 = vsel %vm616, %v600, %v622
      %v624 = vsel %vm212, %v612, %v613
      %v625 = vsel %vm616, %v602, %v624
      %v626 = vsel %vm212, %v613, %v614
      %v627 = vsel %vm616, %v604, %v626
      %634 = vst [vmem:[#allocation2 + $0x150] sm:$0xff] %v617
      %635 = vst [vmem:[#allocation2 + $0x158] sm:$0xff] %v619
      %636 = vst [vmem:[#allocation2 + $0x160] sm:$0xff] %v621
      %637 = vst [vmem:[#allocation2 + $0x168] sm:$0xff] %v623
      %638 = vst [vmem:[#allocation2 + $0x170] sm:$0xff] %v625
      %639 = vst [vmem:[#allocation2 + $0x178] sm:$0xff] %v627
      %v640 = vld [vmem:[%s165 + $0x4] sm:$0xff]
      %v641 = vld [vmem:[%s165 + $0xc] sm:$0xff]
      %v642 = vld [vmem:[%s165 + $0x14] sm:$0xff]
      %v643 = vld [vmem:[%s165 + $0x1c] sm:$0xf]
      %v644 = vld [vmem:[%s165 + $0x34] sm:$0xff]
      %v645 = vld [vmem:[%s165 + $0x3c] sm:$0xff]
      %v646 = vld [vmem:[%s165 + $0x44] sm:$0xff]
      %v647 = vld [vmem:[%s165 + $0x4c] sm:$0xf]
      %656 = vrot.lane.b32.xlu0 %v640, 117
      %v657 = vpop.permute.xlu0 %656
      %658 = vrot.lane.b32.xlu0 %v641, 117
      %v659 = vpop.permute.xlu0 %658
      %660 = vrot.lane.b32.xlu0 %v642, 117
      %v661 = vpop.permute.xlu0 %660
      %662 = vrot.lane.b32.xlu0 %v643, 117
      %v663 = vpop.permute.xlu0 %662
      %664 = vrot.lane.b32.xlu0 %v644, 117
      %v665 = vpop.permute.xlu0 %664
      %666 = vrot.lane.b32.xlu0 %v645, 117
      %v667 = vpop.permute.xlu0 %666
      %668 = vrot.lane.b32.xlu0 %v646, 117
      %v669 = vpop.permute.xlu0 %668
      %670 = vrot.lane.b32.xlu0 %v647, 117
      %v671 = vpop.permute.xlu0 %670
      %v672 = vrot.slane %v657, 4
      %v673 = vrot.slane %v659, 4
      %v674 = vrot.slane %v661, 4
      %v675 = vrot.slane %v663, 4
      %v676 = vrot.slane %v665, 4
      %v677 = vrot.slane %v667, 4
      %v678 = vrot.slane %v669, 4
      %v679 = vrot.slane %v671, 4
      %v680 = vsel %vm212, %v672, %v673
      %vm681 = vcmask 957440
      %v682 = vsel %vm681, %v657, %v680
      %v683 = vsel %vm212, %v673, %v674
      %v684 = vsel %vm681, %v659, %v683
      %v685 = vsel %vm212, %v674, %v675
      %v686 = vsel %vm681, %v661, %v685
      %v687 = vsel %vm212, %v676, %v677
      %v688 = vsel %vm681, %v665, %v687
      %v689 = vsel %vm212, %v677, %v678
      %v690 = vsel %vm681, %v667, %v689
      %v691 = vsel %vm212, %v678, %v679
      %v692 = vsel %vm681, %v669, %v691
      %699 = vst [vmem:[#allocation2 + $0x180] sm:$0xff] %v682
      %700 = vst [vmem:[#allocation2 + $0x188] sm:$0xff] %v684
      %701 = vst [vmem:[#allocation2 + $0x190] sm:$0xff] %v686
      %702 = vst [vmem:[#allocation2 + $0x198] sm:$0xff] %v688
      %703 = vst [vmem:[#allocation2 + $0x1a0] sm:$0xff] %v690
      %704 = vst [vmem:[#allocation2 + $0x1a8] sm:$0xff] %v692
      %v705 = vld [vmem:[%s165 + $0x8] sm:$0xff]
      %v706 = vld [vmem:[%s165 + $0x10] sm:$0xff]
      %v707 = vld [vmem:[%s165 + $0x18] sm:$0xff]
      %v708 = vld [vmem:[%s165 + $0x20] sm:$0xf]
      %v709 = vld [vmem:[%s165 + $0x38] sm:$0xff]
      %v710 = vld [vmem:[%s165 + $0x40] sm:$0xff]
      %v711 = vld [vmem:[%s165 + $0x48] sm:$0xff]
      %v712 = vld [vmem:[%s165 + $0x50] sm:$0xf]
      %721 = vrot.lane.b32.xlu0 %v705, 11
      %v722 = vpop.permute.xlu0 %721
      %723 = vrot.lane.b32.xlu0 %v706, 11
      %v724 = vpop.permute.xlu0 %723
      %725 = vrot.lane.b32.xlu0 %v707, 11
      %v726 = vpop.permute.xlu0 %725
      %727 = vrot.lane.b32.xlu0 %v708, 11
      %v728 = vpop.permute.xlu0 %727
      %729 = vrot.lane.b32.xlu0 %v709, 11
      %v730 = vpop.permute.xlu0 %729
      %731 = vrot.lane.b32.xlu0 %v710, 11
      %v732 = vpop.permute.xlu0 %731
      %733 = vrot.lane.b32.xlu0 %v711, 11
      %v734 = vpop.permute.xlu0 %733
      %735 = vrot.lane.b32.xlu0 %v712, 11
      %v736 = vpop.permute.xlu0 %735
      %v737 = vrot.slane %v722, 4
      %v738 = vrot.slane %v724, 4
      %v739 = vrot.slane %v726, 4
      %v740 = vrot.slane %v728, 4
      %v741 = vrot.slane %v730, 4
      %v742 = vrot.slane %v732, 4
      %v743 = vrot.slane %v734, 4
      %v744 = vrot.slane %v736, 4
      %v745 = vsel %vm212, %v737, %v738
      %v746 = vsel %vm214, %v722, %v745
      %v747 = vsel %vm212, %v738, %v739
      %v748 = vsel %vm214, %v724, %v747
      %v749 = vsel %vm212, %v739, %v740
      %v750 = vsel %vm214, %v726, %v749
      %v751 = vsel %vm212, %v741, %v742
      %v752 = vsel %vm214, %v730, %v751
      %v753 = vsel %vm212, %v742, %v743
      %v754 = vsel %vm214, %v732, %v753
      %v755 = vsel %vm212, %v743, %v744
      %v756 = vsel %vm214, %v734, %v755
      %763 = vst [vmem:[#allocation2 + $0x1b0] sm:$0xff] %v746
      %764 = vst [vmem:[#allocation2 + $0x1b8] sm:$0xff] %v748
      %765 = vst [vmem:[#allocation2 + $0x1c0] sm:$0xff] %v750
      %766 = vst [vmem:[#allocation2 + $0x1c8] sm:$0xff] %v752
      %767 = vst [vmem:[#allocation2 + $0x1d0] sm:$0xff] %v754
      %768 = vst [vmem:[#allocation2 + $0x1d8] sm:$0xff] %v756
      %v769 = vld [vmem:[%s165 + $0x8] sm:$0xff]
      %v770 = vld [vmem:[%s165 + $0x10] sm:$0xff]
      %v771 = vld [vmem:[%s165 + $0x18] sm:$0xff]
      %v772 = vld [vmem:[%s165 + $0x20] sm:$0xf]
      %v773 = vld [vmem:[%s165 + $0x38] sm:$0xff]
      %v774 = vld [vmem:[%s165 + $0x40] sm:$0xff]
      %v775 = vld [vmem:[%s165 + $0x48] sm:$0xff]
      %v776 = vld [vmem:[%s165 + $0x50] sm:$0xf]
      %785 = vrot.lane.b32.xlu0 %v769, 10
      %v786 = vpop.permute.xlu0 %785
      %787 = vrot.lane.b32.xlu0 %v770, 10
      %v788 = vpop.permute.xlu0 %787
      %789 = vrot.lane.b32.xlu0 %v771, 10
      %v790 = vpop.permute.xlu0 %789
      %791 = vrot.lane.b32.xlu0 %v772, 10
      %v792 = vpop.permute.xlu0 %791
      %793 = vrot.lane.b32.xlu0 %v773, 10
      %v794 = vpop.permute.xlu0 %793
      %795 = vrot.lane.b32.xlu0 %v774, 10
      %v796 = vpop.permute.xlu0 %795
      %797 = vrot.lane.b32.xlu0 %v775, 10
      %v798 = vpop.permute.xlu0 %797
      %799 = vrot.lane.b32.xlu0 %v776, 10
      %v800 = vpop.permute.xlu0 %799
      %v801 = vrot.slane %v786, 4
      %v802 = vrot.slane %v788, 4
      %v803 = vrot.slane %v790, 4
      %v804 = vrot.slane %v792, 4
      %v805 = vrot.slane %v794, 4
      %v806 = vrot.slane %v796, 4
      %v807 = vrot.slane %v798, 4
      %v808 = vrot.slane %v800, 4
      %v809 = vsel %vm212, %v801, %v802
      %v810 = vsel %vm279, %v786, %v809
      %v811 = vsel %vm212, %v802, %v803
      %v812 = vsel %vm279, %v788, %v811
      %v813 = vsel %vm212, %v803, %v804
      %v814 = vsel %vm279, %v790, %v813
      %v815 = vsel %vm212, %v805, %v806
      %v816 = vsel %vm279, %v794, %v815
      %v817 = vsel %vm212, %v806, %v807
      %v818 = vsel %vm279, %v796, %v817
      %v819 = vsel %vm212, %v807, %v808
      %v820 = vsel %vm279, %v798, %v819
      %827 = vst [vmem:[#allocation2 + $0x1e0] sm:$0xff] %v810
      %828 = vst [vmem:[#allocation2 + $0x1e8] sm:$0xff] %v812
      %829 = vst [vmem:[#allocation2 + $0x1f0] sm:$0xff] %v814
      %830 = vst [vmem:[#allocation2 + $0x1f8] sm:$0xff] %v816
      %831 = vst [vmem:[#allocation2 + $0x200] sm:$0xff] %v818
      %832 = vst [vmem:[#allocation2 + $0x208] sm:$0xff] %v820
      %v833 = vld [vmem:[%s165 + $0x8] sm:$0xff]
      %v834 = vld [vmem:[%s165 + $0x10] sm:$0xff]
      %v835 = vld [vmem:[%s165 + $0x18] sm:$0xff]
      %v836 = vld [vmem:[%s165 + $0x20] sm:$0xf]
      %v837 = vld [vmem:[%s165 + $0x38] sm:$0xff]
      %v838 = vld [vmem:[%s165 + $0x40] sm:$0xff]
      %v839 = vld [vmem:[%s165 + $0x48] sm:$0xff]
      %v840 = vld [vmem:[%s165 + $0x50] sm:$0xf]
      %849 = vrot.lane.b32.xlu0 %v833, 9
      %v850 = vpop.permute.xlu0 %849
      %851 = vrot.lane.b32.xlu0 %v834, 9
      %v852 = vpop.permute.xlu0 %851
      %853 = vrot.lane.b32.xlu0 %v835, 9
      %v854 = vpop.permute.xlu0 %853
      %855 = vrot.lane.b32.xlu0 %v836, 9
      %v856 = vpop.permute.xlu0 %855
      %857 = vrot.lane.b32.xlu0 %v837, 9
      %v858 = vpop.permute.xlu0 %857
      %859 = vrot.lane.b32.xlu0 %v838, 9
      %v860 = vpop.permute.xlu0 %859
      %861 = vrot.lane.b32.xlu0 %v839, 9
      %v862 = vpop.permute.xlu0 %861
      %863 = vrot.lane.b32.xlu0 %v840, 9
      %v864 = vpop.permute.xlu0 %863
      %v865 = vrot.slane %v850, 4
      %v866 = vrot.slane %v852, 4
      %v867 = vrot.slane %v854, 4
      %v868 = vrot.slane %v856, 4
      %v869 = vrot.slane %v858, 4
      %v870 = vrot.slane %v860, 4
      %v871 = vrot.slane %v862, 4
      %v872 = vrot.slane %v864, 4
      %v873 = vsel %vm212, %v865, %v866
      %v874 = vsel %vm344, %v850, %v873
      %v875 = vsel %vm212, %v866, %v867
      %v876 = vsel %vm344, %v852, %v875
      %v877 = vsel %vm212, %v867, %v868
      %v878 = vsel %vm344, %v854, %v877
      %v879 = vsel %vm212, %v869, %v870
      %v880 = vsel %vm344, %v858, %v879
      %v881 = vsel %vm212, %v870, %v871
      %v882 = vsel %vm344, %v860, %v881
      %v883 = vsel %vm212, %v871, %v872
      %v884 = vsel %vm344, %v862, %v883
      %891 = vst [vmem:[#allocation2 + $0x210] sm:$0xff] %v874
      %892 = vst [vmem:[#allocation2 + $0x218] sm:$0xff] %v876
      %893 = vst [vmem:[#allocation2 + $0x220] sm:$0xff] %v878
      %894 = vst [vmem:[#allocation2 + $0x228] sm:$0xff] %v880
      %895 = vst [vmem:[#allocation2 + $0x230] sm:$0xff] %v882
      %896 = vst [vmem:[#allocation2 + $0x238] sm:$0xff] %v884
      %v897 = vld [vmem:[%s165 + $0x8] sm:$0xff]
      %v898 = vld [vmem:[%s165 + $0x10] sm:$0xff]
      %v899 = vld [vmem:[%s165 + $0x18] sm:$0xff]
      %v900 = vld [vmem:[%s165 + $0x20] sm:$0xf]
      %v901 = vld [vmem:[%s165 + $0x38] sm:$0xff]
      %v902 = vld [vmem:[%s165 + $0x40] sm:$0xff]
      %v903 = vld [vmem:[%s165 + $0x48] sm:$0xff]
      %v904 = vld [vmem:[%s165 + $0x50] sm:$0xf]
      %913 = vrot.lane.b32.xlu0 %v897, 1
      %v914 = vpop.permute.xlu0 %913
      %915 = vrot.lane.b32.xlu0 %v898, 1
      %v916 = vpop.permute.xlu0 %915
      %917 = vrot.lane.b32.xlu0 %v899, 1
      %v918 = vpop.permute.xlu0 %917
      %919 = vrot.lane.b32.xlu0 %v900, 1
      %v920 = vpop.permute.xlu0 %919
      %921 = vrot.lane.b32.xlu0 %v901, 1
      %v922 = vpop.permute.xlu0 %921
      %923 = vrot.lane.b32.xlu0 %v902, 1
      %v924 = vpop.permute.xlu0 %923
      %925 = vrot.lane.b32.xlu0 %v903, 1
      %v926 = vpop.permute.xlu0 %925
      %927 = vrot.lane.b32.xlu0 %v904, 1
      %v928 = vpop.permute.xlu0 %927
      %v929 = vrot.slane %v914, 4
      %v930 = vrot.slane %v916, 4
      %v931 = vrot.slane %v918, 4
      %v932 = vrot.slane %v920, 4
      %v933 = vrot.slane %v922, 4
      %v934 = vrot.slane %v924, 4
      %v935 = vrot.slane %v926, 4
      %v936 = vrot.slane %v928, 4
      %v937 = vsel %vm212, %v929, %v930
      %v938 = vsel %vm409, %v914, %v937
      %v939 = vsel %vm212, %v930, %v931
      %v940 = vsel %vm409, %v916, %v939
      %v941 = vsel %vm212, %v931, %v932
      %v942 = vsel %vm409, %v918, %v941
      %v943 = vsel %vm212, %v933, %v934
      %v944 = vsel %vm409, %v922, %v943
      %v945 = vsel %vm212, %v934, %v935
      %v946 = vsel %vm409, %v924, %v945
      %v947 = vsel %vm212, %v935, %v936
      %v948 = vsel %vm409, %v926, %v947
      %955 = vst [vmem:[#allocation2 + $0x240] sm:$0xff] %v938
      %956 = vst [vmem:[#allocation2 + $0x248] sm:$0xff] %v940
      %957 = vst [vmem:[#allocation2 + $0x250] sm:$0xff] %v942
      %958 = vst [vmem:[#allocation2 + $0x258] sm:$0xff] %v944
      %959 = vst [vmem:[#allocation2 + $0x260] sm:$0xff] %v946
      %960 = vst [vmem:[#allocation2 + $0x268] sm:$0xff] %v948
      %v961 = vld [vmem:[%s165 + $0xc] sm:$0xff]
      %v962 = vld [vmem:[%s165 + $0x14] sm:$0xff]
      %v963 = vld [vmem:[%s165 + $0x1c] sm:$0xff]
      %v964 = vld [vmem:[%s165 + $0x3c] sm:$0xff]
      %v965 = vld [vmem:[%s165 + $0x44] sm:$0xff]
      %v966 = vld [vmem:[%s165 + $0x4c] sm:$0xff]
      %967 = vst [vmem:[#allocation2 + $0x270] sm:$0xff] %v961
      %968 = vst [vmem:[#allocation2 + $0x278] sm:$0xff] %v962
      %969 = vst [vmem:[#allocation2 + $0x280] sm:$0xff] %v963
      %970 = vst [vmem:[#allocation2 + $0x288] sm:$0xff] %v964
      %971 = vst [vmem:[#allocation2 + $0x290] sm:$0xff] %v965
      %972 = vst [vmem:[#allocation2 + $0x298] sm:$0xff] %v966
      %v973 = vld [vmem:[%s165 + $0xc] sm:$0xff]
      %v974 = vld [vmem:[%s165 + $0x14] sm:$0xff]
      %v975 = vld [vmem:[%s165 + $0x1c] sm:$0xff]
      %v976 = vld [vmem:[%s165 + $0x24] sm:$0xf]
      %v977 = vld [vmem:[%s165 + $0x3c] sm:$0xff]
      %v978 = vld [vmem:[%s165 + $0x44] sm:$0xff]
      %v979 = vld [vmem:[%s165 + $0x4c] sm:$0xff]
      %v980 = vld [vmem:[%s165 + $0x54] sm:$0xf]
      %989 = vrot.lane.b32.xlu0 %v973, 127
      %v990 = vpop.permute.xlu0 %989
      %991 = vrot.lane.b32.xlu0 %v974, 127
      %v992 = vpop.permute.xlu0 %991
      %993 = vrot.lane.b32.xlu0 %v975, 127
      %v994 = vpop.permute.xlu0 %993
      %995 = vrot.lane.b32.xlu0 %v976, 127
      %v996 = vpop.permute.xlu0 %995
      %997 = vrot.lane.b32.xlu0 %v977, 127
      %v998 = vpop.permute.xlu0 %997
      %999 = vrot.lane.b32.xlu0 %v978, 127
      %v1000 = vpop.permute.xlu0 %999
      %1001 = vrot.lane.b32.xlu0 %v979, 127
      %v1002 = vpop.permute.xlu0 %1001
      %1003 = vrot.lane.b32.xlu0 %v980, 127
      %v1004 = vpop.permute.xlu0 %1003
      %v1005 = vrot.slane %v990, 4
      %v1006 = vrot.slane %v992, 4
      %v1007 = vrot.slane %v994, 4
      %v1008 = vrot.slane %v996, 4
      %v1009 = vrot.slane %v998, 4
      %v1010 = vrot.slane %v1000, 4
      %v1011 = vrot.slane %v1002, 4
      %v1012 = vrot.slane %v1004, 4
      %v1013 = vsel %vm212, %v1005, %v1006
      %v1014 = vsel %vm486, %v990, %v1013
      %v1015 = vsel %vm212, %v1006, %v1007
      %v1016 = vsel %vm486, %v992, %v1015
      %v1017 = vsel %vm212, %v1007, %v1008
      %v1018 = vsel %vm486, %v994, %v1017
      %v1019 = vsel %vm212, %v1009, %v1010
      %v1020 = vsel %vm486, %v998, %v1019
      %v1021 = vsel %vm212, %v1010, %v1011
      %v1022 = vsel %vm486, %v1000, %v1021
      %v1023 = vsel %vm212, %v1011, %v1012
      %v1024 = vsel %vm486, %v1002, %v1023
      %1031 = vst [vmem:[#allocation2 + $0x2a0] sm:$0xff] %v1014
      %1032 = vst [vmem:[#allocation2 + $0x2a8] sm:$0xff] %v1016
      %1033 = vst [vmem:[#allocation2 + $0x2b0] sm:$0xff] %v1018
      %1034 = vst [vmem:[#allocation2 + $0x2b8] sm:$0xff] %v1020
      %1035 = vst [vmem:[#allocation2 + $0x2c0] sm:$0xff] %v1022
      %1036 = vst [vmem:[#allocation2 + $0x2c8] sm:$0xff] %v1024
      %v1037 = vld [vmem:[%s165 + $0xc] sm:$0xff]
      %v1038 = vld [vmem:[%s165 + $0x14] sm:$0xff]
      %v1039 = vld [vmem:[%s165 + $0x1c] sm:$0xff]
      %v1040 = vld [vmem:[%s165 + $0x24] sm:$0xf]
      %v1041 = vld [vmem:[%s165 + $0x3c] sm:$0xff]
      %v1042 = vld [vmem:[%s165 + $0x44] sm:$0xff]
      %v1043 = vld [vmem:[%s165 + $0x4c] sm:$0xff]
      %v1044 = vld [vmem:[%s165 + $0x54] sm:$0xf]
      %1053 = vrot.lane.b32.xlu0 %v1037, 119
      %v1054 = vpop.permute.xlu0 %1053
      %1055 = vrot.lane.b32.xlu0 %v1038, 119
      %v1056 = vpop.permute.xlu0 %1055
      %1057 = vrot.lane.b32.xlu0 %v1039, 119
      %v1058 = vpop.permute.xlu0 %1057
      %1059 = vrot.lane.b32.xlu0 %v1040, 119
      %v1060 = vpop.permute.xlu0 %1059
      %1061 = vrot.lane.b32.xlu0 %v1041, 119
      %v1062 = vpop.permute.xlu0 %1061
      %1063 = vrot.lane.b32.xlu0 %v1042, 119
      %v1064 = vpop.permute.xlu0 %1063
      %1065 = vrot.lane.b32.xlu0 %v1043, 119
      %v1066 = vpop.permute.xlu0 %1065
      %1067 = vrot.lane.b32.xlu0 %v1044, 119
      %v1068 = vpop.permute.xlu0 %1067
      %v1069 = vrot.slane %v1054, 4
      %v1070 = vrot.slane %v1056, 4
      %v1071 = vrot.slane %v1058, 4
      %v1072 = vrot.slane %v1060, 4
      %v1073 = vrot.slane %v1062, 4
      %v1074 = vrot.slane %v1064, 4
      %v1075 = vrot.slane %v1066, 4
      %v1076 = vrot.slane %v1068, 4
      %v1077 = vsel %vm212, %v1069, %v1070
      %v1078 = vsel %vm551, %v1054, %v1077
      %v1079 = vsel %vm212, %v1070, %v1071
      %v1080 = vsel %vm551, %v1056, %v1079
      %v1081 = vsel %vm212, %v1071, %v1072
      %v1082 = vsel %vm551, %v1058, %v1081
      %v1083 = vsel %vm212, %v1073, %v1074
      %v1084 = vsel %vm551, %v1062, %v1083
      %v1085 = vsel %vm212, %v1074, %v1075
      %v1086 = vsel %vm551, %v1064, %v1085
      %v1087 = vsel %vm212, %v1075, %v1076
      %v1088 = vsel %vm551, %v1066, %v1087
      %1095 = vst [vmem:[#allocation2 + $0x2d0] sm:$0xff] %v1078
      %1096 = vst [vmem:[#allocation2 + $0x2d8] sm:$0xff] %v1080
      %1097 = vst [vmem:[#allocation2 + $0x2e0] sm:$0xff] %v1082
      %1098 = vst [vmem:[#allocation2 + $0x2e8] sm:$0xff] %v1084
      %1099 = vst [vmem:[#allocation2 + $0x2f0] sm:$0xff] %v1086
      %1100 = vst [vmem:[#allocation2 + $0x2f8] sm:$0xff] %v1088
      %v1101 = vld [vmem:[%s165 + $0xc] sm:$0xff]
      %v1102 = vld [vmem:[%s165 + $0x14] sm:$0xff]
      %v1103 = vld [vmem:[%s165 + $0x1c] sm:$0xff]
      %v1104 = vld [vmem:[%s165 + $0x24] sm:$0xf]
      %v1105 = vld [vmem:[%s165 + $0x3c] sm:$0xff]
      %v1106 = vld [vmem:[%s165 + $0x44] sm:$0xff]
      %v1107 = vld [vmem:[%s165 + $0x4c] sm:$0xff]
      %v1108 = vld [vmem:[%s165 + $0x54] sm:$0xf]
      %1117 = vrot.lane.b32.xlu0 %v1101, 118
      %v1118 = vpop.permute.xlu0 %1117
      %1119 = vrot.lane.b32.xlu0 %v1102, 118
      %v1120 = vpop.permute.xlu0 %1119
      %1121 = vrot.lane.b32.xlu0 %v1103, 118
      %v1122 = vpop.permute.xlu0 %1121
      %1123 = vrot.lane.b32.xlu0 %v1104, 118
      %v1124 = vpop.permute.xlu0 %1123
      %1125 = vrot.lane.b32.xlu0 %v1105, 118
      %v1126 = vpop.permute.xlu0 %1125
      %1127 = vrot.lane.b32.xlu0 %v1106, 118
      %v1128 = vpop.permute.xlu0 %1127
      %1129 = vrot.lane.b32.xlu0 %v1107, 118
      %v1130 = vpop.permute.xlu0 %1129
      %1131 = vrot.lane.b32.xlu0 %v1108, 118
      %v1132 = vpop.permute.xlu0 %1131
      %v1133 = vrot.slane %v1118, 4
      %v1134 = vrot.slane %v1120, 4
      %v1135 = vrot.slane %v1122, 4
      %v1136 = vrot.slane %v1124, 4
      %v1137 = vrot.slane %v1126, 4
      %v1138 = vrot.slane %v1128, 4
      %v1139 = vrot.slane %v1130, 4
      %v1140 = vrot.slane %v1132, 4
      %v1141 = vsel %vm212, %v1133, %v1134
      %v1142 = vsel %vm616, %v1118, %v1141
      %v1143 = vsel %vm212, %v1134, %v1135
      %v1144 = vsel %vm616, %v1120, %v1143
      %v1145 = vsel %vm212, %v1135, %v1136
      %v1146 = vsel %vm616, %v1122, %v1145
      %v1147 = vsel %vm212, %v1137, %v1138
      %v1148 = vsel %vm616, %v1126, %v1147
      %v1149 = vsel %vm212, %v1138, %v1139
      %v1150 = vsel %vm616, %v1128, %v1149
      %v1151 = vsel %vm212, %v1139, %v1140
      %v1152 = vsel %vm616, %v1130, %v1151
      %1159 = vst [vmem:[#allocation2 + $0x300] sm:$0xff] %v1142
      %1160 = vst [vmem:[#allocation2 + $0x308] sm:$0xff] %v1144
      %1161 = vst [vmem:[#allocation2 + $0x310] sm:$0xff] %v1146
      %1162 = vst [vmem:[#allocation2 + $0x318] sm:$0xff] %v1148
      %1163 = vst [vmem:[#allocation2 + $0x320] sm:$0xff] %v1150
      %1164 = vst [vmem:[#allocation2 + $0x328] sm:$0xff] %v1152
      %v1165 = vld [vmem:[%s165 + $0xc] sm:$0xff]
      %v1166 = vld [vmem:[%s165 + $0x14] sm:$0xff]
      %v1167 = vld [vmem:[%s165 + $0x1c] sm:$0xff]
      %v1168 = vld [vmem:[%s165 + $0x24] sm:$0xf]
      %v1169 = vld [vmem:[%s165 + $0x3c] sm:$0xff]
      %v1170 = vld [vmem:[%s165 + $0x44] sm:$0xff]
      %v1171 = vld [vmem:[%s165 + $0x4c] sm:$0xff]
      %v1172 = vld [vmem:[%s165 + $0x54] sm:$0xf]
      %1181 = vrot.lane.b32.xlu0 %v1165, 117
      %v1182 = vpop.permute.xlu0 %1181
      %1183 = vrot.lane.b32.xlu0 %v1166, 117
      %v1184 = vpop.permute.xlu0 %1183
      %1185 = vrot.lane.b32.xlu0 %v1167, 117
      %v1186 = vpop.permute.xlu0 %1185
      %1187 = vrot.lane.b32.xlu0 %v1168, 117
      %v1188 = vpop.permute.xlu0 %1187
      %1189 = vrot.lane.b32.xlu0 %v1169, 117
      %v1190 = vpop.permute.xlu0 %1189
      %1191 = vrot.lane.b32.xlu0 %v1170, 117
      %v1192 = vpop.permute.xlu0 %1191
      %1193 = vrot.lane.b32.xlu0 %v1171, 117
      %v1194 = vpop.permute.xlu0 %1193
      %1195 = vrot.lane.b32.xlu0 %v1172, 117
      %v1196 = vpop.permute.xlu0 %1195
      %v1197 = vrot.slane %v1182, 4
      %v1198 = vrot.slane %v1184, 4
      %v1199 = vrot.slane %v1186, 4
      %v1200 = vrot.slane %v1188, 4
      %v1201 = vrot.slane %v1190, 4
      %v1202 = vrot.slane %v1192, 4
      %v1203 = vrot.slane %v1194, 4
      %v1204 = vrot.slane %v1196, 4
      %v1205 = vsel %vm212, %v1197, %v1198
      %v1206 = vsel %vm681, %v1182, %v1205
      %v1207 = vsel %vm212, %v1198, %v1199
      %v1208 = vsel %vm681, %v1184, %v1207
      %v1209 = vsel %vm212, %v1199, %v1200
      %v1210 = vsel %vm681, %v1186, %v1209
      %v1211 = vsel %vm212, %v1201, %v1202
      %v1212 = vsel %vm681, %v1190, %v1211
      %v1213 = vsel %vm212, %v1202, %v1203
      %v1214 = vsel %vm681, %v1192, %v1213
      %v1215 = vsel %vm212, %v1203, %v1204
      %v1216 = vsel %vm681, %v1194, %v1215
      %1223 = vst [vmem:[#allocation2 + $0x330] sm:$0xff] %v1206
      %1224 = vst [vmem:[#allocation2 + $0x338] sm:$0xff] %v1208
      %1225 = vst [vmem:[#allocation2 + $0x340] sm:$0xff] %v1210
      %1226 = vst [vmem:[#allocation2 + $0x348] sm:$0xff] %v1212
      %1227 = vst [vmem:[#allocation2 + $0x350] sm:$0xff] %v1214
      %1228 = vst [vmem:[#allocation2 + $0x358] sm:$0xff] %v1216
      %v1229 = vld [vmem:[%s165 + $0x10] sm:$0xff]
      %v1230 = vld [vmem:[%s165 + $0x18] sm:$0xff]
      %v1231 = vld [vmem:[%s165 + $0x20] sm:$0xff]
      %v1232 = vld [vmem:[%s165 + $0x28] sm:$0xf]
      %v1233 = vld [vmem:[%s165 + $0x40] sm:$0xff]
      %v1234 = vld [vmem:[%s165 + $0x48] sm:$0xff]
      %v1235 = vld [vmem:[%s165 + $0x50] sm:$0xff]
      %v1236 = vld [vmem:[%s165 + $0x58] sm:$0xf]
      %1245 = vrot.lane.b32.xlu0 %v1229, 11
      %v1246 = vpop.permute.xlu0 %1245
      %1247 = vrot.lane.b32.xlu0 %v1230, 11
      %v1248 = vpop.permute.xlu0 %1247
      %1249 = vrot.lane.b32.xlu0 %v1231, 11
      %v1250 = vpop.permute.xlu0 %1249
      %1251 = vrot.lane.b32.xlu0 %v1232, 11
      %v1252 = vpop.permute.xlu0 %1251
      %1253 = vrot.lane.b32.xlu0 %v1233, 11
      %v1254 = vpop.permute.xlu0 %1253
      %1255 = vrot.lane.b32.xlu0 %v1234, 11
      %v1256 = vpop.permute.xlu0 %1255
      %1257 = vrot.lane.b32.xlu0 %v1235, 11
      %v1258 = vpop.permute.xlu0 %1257
      %1259 = vrot.lane.b32.xlu0 %v1236, 11
      %v1260 = vpop.permute.xlu0 %1259
      %v1261 = vrot.slane %v1246, 4
      %v1262 = vrot.slane %v1248, 4
      %v1263 = vrot.slane %v1250, 4
      %v1264 = vrot.slane %v1252, 4
      %v1265 = vrot.slane %v1254, 4
      %v1266 = vrot.slane %v1256, 4
      %v1267 = vrot.slane %v1258, 4
      %v1268 = vrot.slane %v1260, 4
      %v1269 = vsel %vm212, %v1261, %v1262
      %v1270 = vsel %vm214, %v1246, %v1269
      %v1271 = vsel %vm212, %v1262, %v1263
      %v1272 = vsel %vm214, %v1248, %v1271
      %v1273 = vsel %vm212, %v1263, %v1264
      %v1274 = vsel %vm214, %v1250, %v1273
      %v1275 = vsel %vm212, %v1265, %v1266
      %v1276 = vsel %vm214, %v1254, %v1275
      %v1277 = vsel %vm212, %v1266, %v1267
      %v1278 = vsel %vm214, %v1256, %v1277
      %v1279 = vsel %vm212, %v1267, %v1268
      %v1280 = vsel %vm214, %v1258, %v1279
      %1287 = vst [vmem:[#allocation2 + $0x360] sm:$0xff] %v1270
      %1288 = vst [vmem:[#allocation2 + $0x368] sm:$0xff] %v1272
      %1289 = vst [vmem:[#allocation2 + $0x370] sm:$0xff] %v1274
      %1290 = vst [vmem:[#allocation2 + $0x378] sm:$0xff] %v1276
      %1291 = vst [vmem:[#allocation2 + $0x380] sm:$0xff] %v1278
      %1292 = vst [vmem:[#allocation2 + $0x388] sm:$0xff] %v1280
      %v1293 = vld [vmem:[%s165 + $0x10] sm:$0xff]
      %v1294 = vld [vmem:[%s165 + $0x18] sm:$0xff]
      %v1295 = vld [vmem:[%s165 + $0x20] sm:$0xff]
      %v1296 = vld [vmem:[%s165 + $0x28] sm:$0xf]
      %v1297 = vld [vmem:[%s165 + $0x40] sm:$0xff]
      %v1298 = vld [vmem:[%s165 + $0x48] sm:$0xff]
      %v1299 = vld [vmem:[%s165 + $0x50] sm:$0xff]
      %v1300 = vld [vmem:[%s165 + $0x58] sm:$0xf]
      %1309 = vrot.lane.b32.xlu0 %v1293, 10
      %v1310 = vpop.permute.xlu0 %1309
      %1311 = vrot.lane.b32.xlu0 %v1294, 10
      %v1312 = vpop.permute.xlu0 %1311
      %1313 = vrot.lane.b32.xlu0 %v1295, 10
      %v1314 = vpop.permute.xlu0 %1313
      %1315 = vrot.lane.b32.xlu0 %v1296, 10
      %v1316 = vpop.permute.xlu0 %1315
      %1317 = vrot.lane.b32.xlu0 %v1297, 10
      %v1318 = vpop.permute.xlu0 %1317
      %1319 = vrot.lane.b32.xlu0 %v1298, 10
      %v1320 = vpop.permute.xlu0 %1319
      %1321 = vrot.lane.b32.xlu0 %v1299, 10
      %v1322 = vpop.permute.xlu0 %1321
      %1323 = vrot.lane.b32.xlu0 %v1300, 10
      %v1324 = vpop.permute.xlu0 %1323
      %v1325 = vrot.slane %v1310, 4
      %v1326 = vrot.slane %v1312, 4
      %v1327 = vrot.slane %v1314, 4
      %v1328 = vrot.slane %v1316, 4
      %v1329 = vrot.slane %v1318, 4
      %v1330 = vrot.slane %v1320, 4
      %v1331 = vrot.slane %v1322, 4
      %v1332 = vrot.slane %v1324, 4
      %v1333 = vsel %vm212, %v1325, %v1326
      %v1334 = vsel %vm279, %v1310, %v1333
      %v1335 = vsel %vm212, %v1326, %v1327
      %v1336 = vsel %vm279, %v1312, %v1335
      %v1337 = vsel %vm212, %v1327, %v1328
      %v1338 = vsel %vm279, %v1314, %v1337
      %v1339 = vsel %vm212, %v1329, %v1330
      %v1340 = vsel %vm279, %v1318, %v1339
      %v1341 = vsel %vm212, %v1330, %v1331
      %v1342 = vsel %vm279, %v1320, %v1341
      %v1343 = vsel %vm212, %v1331, %v1332
      %v1344 = vsel %vm279, %v1322, %v1343
      %1351 = vst [vmem:[#allocation2 + $0x390] sm:$0xff] %v1334
      %1352 = vst [vmem:[#allocation2 + $0x398] sm:$0xff] %v1336
      %1353 = vst [vmem:[#allocation2 + $0x3a0] sm:$0xff] %v1338
      %1354 = vst [vmem:[#allocation2 + $0x3a8] sm:$0xff] %v1340
      %1355 = vst [vmem:[#allocation2 + $0x3b0] sm:$0xff] %v1342
      %1356 = vst [vmem:[#allocation2 + $0x3b8] sm:$0xff] %v1344
      %v1357 = vld [vmem:[%s165 + $0x10] sm:$0xff]
      %v1358 = vld [vmem:[%s165 + $0x18] sm:$0xff]
      %v1359 = vld [vmem:[%s165 + $0x20] sm:$0xff]
      %v1360 = vld [vmem:[%s165 + $0x28] sm:$0xf]
      %v1361 = vld [vmem:[%s165 + $0x40] sm:$0xff]
      %v1362 = vld [vmem:[%s165 + $0x48] sm:$0xff]
      %v1363 = vld [vmem:[%s165 + $0x50] sm:$0xff]
      %v1364 = vld [vmem:[%s165 + $0x58] sm:$0xf]
      %1373 = vrot.lane.b32.xlu0 %v1357, 9
      %v1374 = vpop.permute.xlu0 %1373
      %1375 = vrot.lane.b32.xlu0 %v1358, 9
      %v1376 = vpop.permute.xlu0 %1375
      %1377 = vrot.lane.b32.xlu0 %v1359, 9
      %v1378 = vpop.permute.xlu0 %1377
      %1379 = vrot.lane.b32.xlu0 %v1360, 9
      %v1380 = vpop.permute.xlu0 %1379
      %1381 = vrot.lane.b32.xlu0 %v1361, 9
      %v1382 = vpop.permute.xlu0 %1381
      %1383 = vrot.lane.b32.xlu0 %v1362, 9
      %v1384 = vpop.permute.xlu0 %1383
      %1385 = vrot.lane.b32.xlu0 %v1363, 9
      %v1386 = vpop.permute.xlu0 %1385
      %1387 = vrot.lane.b32.xlu0 %v1364, 9
      %v1388 = vpop.permute.xlu0 %1387
      %v1389 = vrot.slane %v1374, 4
      %v1390 = vrot.slane %v1376, 4
      %v1391 = vrot.slane %v1378, 4
      %v1392 = vrot.slane %v1380, 4
      %v1393 = vrot.slane %v1382, 4
      %v1394 = vrot.slane %v1384, 4
      %v1395 = vrot.slane %v1386, 4
      %v1396 = vrot.slane %v1388, 4
      %v1397 = vsel %vm212, %v1389, %v1390
      %v1398 = vsel %vm344, %v1374, %v1397
      %v1399 = vsel %vm212, %v1390, %v1391
      %v1400 = vsel %vm344, %v1376, %v1399
      %v1401 = vsel %vm212, %v1391, %v1392
      %v1402 = vsel %vm344, %v1378, %v1401
      %v1403 = vsel %vm212, %v1393, %v1394
      %v1404 = vsel %vm344, %v1382, %v1403
      %v1405 = vsel %vm212, %v1394, %v1395
      %v1406 = vsel %vm344, %v1384, %v1405
      %v1407 = vsel %vm212, %v1395, %v1396
      %v1408 = vsel %vm344, %v1386, %v1407
      %1415 = vst [vmem:[#allocation2 + $0x3c0] sm:$0xff] %v1398
      %1416 = vst [vmem:[#allocation2 + $0x3c8] sm:$0xff] %v1400
      %1417 = vst [vmem:[#allocation2 + $0x3d0] sm:$0xff] %v1402
      %1418 = vst [vmem:[#allocation2 + $0x3d8] sm:$0xff] %v1404
      %1419 = vst [vmem:[#allocation2 + $0x3e0] sm:$0xff] %v1406
      %1420 = vst [vmem:[#allocation2 + $0x3e8] sm:$0xff] %v1408
      %v1421 = vld [vmem:[%s165 + $0x10] sm:$0xff]
      %v1422 = vld [vmem:[%s165 + $0x18] sm:$0xff]
      %v1423 = vld [vmem:[%s165 + $0x20] sm:$0xff]
      %v1424 = vld [vmem:[%s165 + $0x28] sm:$0xf]
      %v1425 = vld [vmem:[%s165 + $0x40] sm:$0xff]
      %v1426 = vld [vmem:[%s165 + $0x48] sm:$0xff]
      %v1427 = vld [vmem:[%s165 + $0x50] sm:$0xff]
      %v1428 = vld [vmem:[%s165 + $0x58] sm:$0xf]
      %1437 = vrot.lane.b32.xlu0 %v1421, 1
      %v1438 = vpop.permute.xlu0 %1437
      %1439 = vrot.lane.b32.xlu0 %v1422, 1
      %v1440 = vpop.permute.xlu0 %1439
      %1441 = vrot.lane.b32.xlu0 %v1423, 1
      %v1442 = vpop.permute.xlu0 %1441
      %1443 = vrot.lane.b32.xlu0 %v1424, 1
      %v1444 = vpop.permute.xlu0 %1443
      %1445 = vrot.lane.b32.xlu0 %v1425, 1
      %v1446 = vpop.permute.xlu0 %1445
      %1447 = vrot.lane.b32.xlu0 %v1426, 1
      %v1448 = vpop.permute.xlu0 %1447
      %1449 = vrot.lane.b32.xlu0 %v1427, 1
      %v1450 = vpop.permute.xlu0 %1449
      %1451 = vrot.lane.b32.xlu0 %v1428, 1
      %v1452 = vpop.permute.xlu0 %1451
      %v1453 = vrot.slane %v1438, 4
      %v1454 = vrot.slane %v1440, 4
      %v1455 = vrot.slane %v1442, 4
      %v1456 = vrot.slane %v1444, 4
      %v1457 = vrot.slane %v1446, 4
      %v1458 = vrot.slane %v1448, 4
      %v1459 = vrot.slane %v1450, 4
      %v1460 = vrot.slane %v1452, 4
      %v1461 = vsel %vm212, %v1453, %v1454
      %v1462 = vsel %vm409, %v1438, %v1461
      %v1463 = vsel %vm212, %v1454, %v1455
      %v1464 = vsel %vm409, %v1440, %v1463
      %v1465 = vsel %vm212, %v1455, %v1456
      %v1466 = vsel %vm409, %v1442, %v1465
      %v1467 = vsel %vm212, %v1457, %v1458
      %v1468 = vsel %vm409, %v1446, %v1467
      %v1469 = vsel %vm212, %v1458, %v1459
      %v1470 = vsel %vm409, %v1448, %v1469
      %v1471 = vsel %vm212, %v1459, %v1460
      %v1472 = vsel %vm409, %v1450, %v1471
      %1479 = vst [vmem:[#allocation2 + $0x3f0] sm:$0xff] %v1462
      %1480 = vst [vmem:[#allocation2 + $0x3f8] sm:$0xff] %v1464
      %1481 = vst [vmem:[#allocation2 + $0x400] sm:$0xff] %v1466
      %1482 = vst [vmem:[#allocation2 + $0x408] sm:$0xff] %v1468
      %1483 = vst [vmem:[#allocation2 + $0x410] sm:$0xff] %v1470
      %1484 = vst [vmem:[#allocation2 + $0x418] sm:$0xff] %v1472
      %v1485 = vld [vmem:[%s165 + $0x14] sm:$0xff]
      %v1486 = vld [vmem:[%s165 + $0x1c] sm:$0xff]
      %v1487 = vld [vmem:[%s165 + $0x24] sm:$0xff]
      %v1488 = vld [vmem:[%s165 + $0x44] sm:$0xff]
      %v1489 = vld [vmem:[%s165 + $0x4c] sm:$0xff]
      %v1490 = vld [vmem:[%s165 + $0x54] sm:$0xff]
      %1491 = vst [vmem:[#allocation2 + $0x420] sm:$0xff] %v1485
      %1492 = vst [vmem:[#allocation2 + $0x428] sm:$0xff] %v1486
      %1493 = vst [vmem:[#allocation2 + $0x430] sm:$0xff] %v1487
      %1494 = vst [vmem:[#allocation2 + $0x438] sm:$0xff] %v1488
      %1495 = vst [vmem:[#allocation2 + $0x440] sm:$0xff] %v1489
      %1496 = vst [vmem:[#allocation2 + $0x448] sm:$0xff] %v1490
      %v1497 = vld [vmem:[%s165 + $0x14] sm:$0xff]
      %v1498 = vld [vmem:[%s165 + $0x1c] sm:$0xff]
      %v1499 = vld [vmem:[%s165 + $0x24] sm:$0xff]
      %v1500 = vld [vmem:[%s165 + $0x2c] sm:$0xf]
      %v1501 = vld [vmem:[%s165 + $0x44] sm:$0xff]
      %v1502 = vld [vmem:[%s165 + $0x4c] sm:$0xff]
      %v1503 = vld [vmem:[%s165 + $0x54] sm:$0xff]
      %v1504 = vld [vmem:[%s165 + $0x5c] sm:$0xf]
      %1513 = vrot.lane.b32.xlu0 %v1497, 127
      %v1514 = vpop.permute.xlu0 %1513
      %1515 = vrot.lane.b32.xlu0 %v1498, 127
      %v1516 = vpop.permute.xlu0 %1515
      %1517 = vrot.lane.b32.xlu0 %v1499, 127
      %v1518 = vpop.permute.xlu0 %1517
      %1519 = vrot.lane.b32.xlu0 %v1500, 127
      %v1520 = vpop.permute.xlu0 %1519
      %1521 = vrot.lane.b32.xlu0 %v1501, 127
      %v1522 = vpop.permute.xlu0 %1521
      %1523 = vrot.lane.b32.xlu0 %v1502, 127
      %v1524 = vpop.permute.xlu0 %1523
      %1525 = vrot.lane.b32.xlu0 %v1503, 127
      %v1526 = vpop.permute.xlu0 %1525
      %1527 = vrot.lane.b32.xlu0 %v1504, 127
      %v1528 = vpop.permute.xlu0 %1527
      %v1529 = vrot.slane %v1514, 4
      %v1530 = vrot.slane %v1516, 4
      %v1531 = vrot.slane %v1518, 4
      %v1532 = vrot.slane %v1520, 4
      %v1533 = vrot.slane %v1522, 4
      %v1534 = vrot.slane %v1524, 4
      %v1535 = vrot.slane %v1526, 4
      %v1536 = vrot.slane %v1528, 4
      %v1537 = vsel %vm212, %v1529, %v1530
      %v1538 = vsel %vm486, %v1514, %v1537
      %v1539 = vsel %vm212, %v1530, %v1531
      %v1540 = vsel %vm486, %v1516, %v1539
      %v1541 = vsel %vm212, %v1531, %v1532
      %v1542 = vsel %vm486, %v1518, %v1541
      %v1543 = vsel %vm212, %v1533, %v1534
      %v1544 = vsel %vm486, %v1522, %v1543
      %v1545 = vsel %vm212, %v1534, %v1535
      %v1546 = vsel %vm486, %v1524, %v1545
      %v1547 = vsel %vm212, %v1535, %v1536
      %v1548 = vsel %vm486, %v1526, %v1547
      %1555 = vst [vmem:[#allocation2 + $0x450] sm:$0xff] %v1538
      %1556 = vst [vmem:[#allocation2 + $0x458] sm:$0xff] %v1540
      %1557 = vst [vmem:[#allocation2 + $0x460] sm:$0xff] %v1542
      %1558 = vst [vmem:[#allocation2 + $0x468] sm:$0xff] %v1544
      %1559 = vst [vmem:[#allocation2 + $0x470] sm:$0xff] %v1546
      %1560 = vst [vmem:[#allocation2 + $0x478] sm:$0xff] %v1548
      %v1561 = vld [vmem:[%s165 + $0x14] sm:$0xff]
      %v1562 = vld [vmem:[%s165 + $0x1c] sm:$0xff]
      %v1563 = vld [vmem:[%s165 + $0x24] sm:$0xff]
      %v1564 = vld [vmem:[%s165 + $0x2c] sm:$0xf]
      %v1565 = vld [vmem:[%s165 + $0x44] sm:$0xff]
      %v1566 = vld [vmem:[%s165 + $0x4c] sm:$0xff]
      %v1567 = vld [vmem:[%s165 + $0x54] sm:$0xff]
      %v1568 = vld [vmem:[%s165 + $0x5c] sm:$0xf]
      %1577 = vrot.lane.b32.xlu0 %v1561, 119
      %v1578 = vpop.permute.xlu0 %1577
      %1579 = vrot.lane.b32.xlu0 %v1562, 119
      %v1580 = vpop.permute.xlu0 %1579
      %1581 = vrot.lane.b32.xlu0 %v1563, 119
      %v1582 = vpop.permute.xlu0 %1581
      %1583 = vrot.lane.b32.xlu0 %v1564, 119
      %v1584 = vpop.permute.xlu0 %1583
      %1585 = vrot.lane.b32.xlu0 %v1565, 119
      %v1586 = vpop.permute.xlu0 %1585
      %1587 = vrot.lane.b32.xlu0 %v1566, 119
      %v1588 = vpop.permute.xlu0 %1587
      %1589 = vrot.lane.b32.xlu0 %v1567, 119
      %v1590 = vpop.permute.xlu0 %1589
      %1591 = vrot.lane.b32.xlu0 %v1568, 119
      %v1592 = vpop.permute.xlu0 %1591
      %v1593 = vrot.slane %v1578, 4
      %v1594 = vrot.slane %v1580, 4
      %v1595 = vrot.slane %v1582, 4
      %v1596 = vrot.slane %v1584, 4
      %v1597 = vrot.slane %v1586, 4
      %v1598 = vrot.slane %v1588, 4
      %v1599 = vrot.slane %v1590, 4
      %v1600 = vrot.slane %v1592, 4
      %v1601 = vsel %vm212, %v1593, %v1594
      %v1602 = vsel %vm551, %v1578, %v1601
      %v1603 = vsel %vm212, %v1594, %v1595
      %v1604 = vsel %vm551, %v1580, %v1603
      %v1605 = vsel %vm212, %v1595, %v1596
      %v1606 = vsel %vm551, %v1582, %v1605
      %v1607 = vsel %vm212, %v1597, %v1598
      %v1608 = vsel %vm551, %v1586, %v1607
      %v1609 = vsel %vm212, %v1598, %v1599
      %v1610 = vsel %vm551, %v1588, %v1609
      %v1611 = vsel %vm212, %v1599, %v1600
      %v1612 = vsel %vm551, %v1590, %v1611
      %1619 = vst [vmem:[#allocation2 + $0x480] sm:$0xff] %v1602
      %1620 = vst [vmem:[#allocation2 + $0x488] sm:$0xff] %v1604
      %1621 = vst [vmem:[#allocation2 + $0x490] sm:$0xff] %v1606
      %1622 = vst [vmem:[#allocation2 + $0x498] sm:$0xff] %v1608
      %1623 = vst [vmem:[#allocation2 + $0x4a0] sm:$0xff] %v1610
      %1624 = vst [vmem:[#allocation2 + $0x4a8] sm:$0xff] %v1612
      %v1625 = vld [vmem:[%s165 + $0x14] sm:$0xff]
      %v1626 = vld [vmem:[%s165 + $0x1c] sm:$0xff]
      %v1627 = vld [vmem:[%s165 + $0x24] sm:$0xff]
      %v1628 = vld [vmem:[%s165 + $0x2c] sm:$0xf]
      %v1629 = vld [vmem:[%s165 + $0x44] sm:$0xff]
      %v1630 = vld [vmem:[%s165 + $0x4c] sm:$0xff]
      %v1631 = vld [vmem:[%s165 + $0x54] sm:$0xff]
      %v1632 = vld [vmem:[%s165 + $0x5c] sm:$0xf]
      %1641 = vrot.lane.b32.xlu0 %v1625, 118
      %v1642 = vpop.permute.xlu0 %1641
      %1643 = vrot.lane.b32.xlu0 %v1626, 118
      %v1644 = vpop.permute.xlu0 %1643
      %1645 = vrot.lane.b32.xlu0 %v1627, 118
      %v1646 = vpop.permute.xlu0 %1645
      %1647 = vrot.lane.b32.xlu0 %v1628, 118
      %v1648 = vpop.permute.xlu0 %1647
      %1649 = vrot.lane.b32.xlu0 %v1629, 118
      %v1650 = vpop.permute.xlu0 %1649
      %1651 = vrot.lane.b32.xlu0 %v1630, 118
      %v1652 = vpop.permute.xlu0 %1651
      %1653 = vrot.lane.b32.xlu0 %v1631, 118
      %v1654 = vpop.permute.xlu0 %1653
      %1655 = vrot.lane.b32.xlu0 %v1632, 118
      %v1656 = vpop.permute.xlu0 %1655
      %v1657 = vrot.slane %v1642, 4
      %v1658 = vrot.slane %v1644, 4
      %v1659 = vrot.slane %v1646, 4
      %v1660 = vrot.slane %v1648, 4
      %v1661 = vrot.slane %v1650, 4
      %v1662 = vrot.slane %v1652, 4
      %v1663 = vrot.slane %v1654, 4
      %v1664 = vrot.slane %v1656, 4
      %v1665 = vsel %vm212, %v1657, %v1658
      %v1666 = vsel %vm616, %v1642, %v1665
      %v1667 = vsel %vm212, %v1658, %v1659
      %v1668 = vsel %vm616, %v1644, %v1667
      %v1669 = vsel %vm212, %v1659, %v1660
      %v1670 = vsel %vm616, %v1646, %v1669
      %v1671 = vsel %vm212, %v1661, %v1662
      %v1672 = vsel %vm616, %v1650, %v1671
      %v1673 = vsel %vm212, %v1662, %v1663
      %v1674 = vsel %vm616, %v1652, %v1673
      %v1675 = vsel %vm212, %v1663, %v1664
      %v1676 = vsel %vm616, %v1654, %v1675
      %1683 = vst [vmem:[#allocation2 + $0x4b0] sm:$0xff] %v1666
      %1684 = vst [vmem:[#allocation2 + $0x4b8] sm:$0xff] %v1668
      %1685 = vst [vmem:[#allocation2 + $0x4c0] sm:$0xff] %v1670
      %1686 = vst [vmem:[#allocation2 + $0x4c8] sm:$0xff] %v1672
      %1687 = vst [vmem:[#allocation2 + $0x4d0] sm:$0xff] %v1674
      %1688 = vst [vmem:[#allocation2 + $0x4d8] sm:$0xff] %v1676
      %v1689 = vld [vmem:[%s165 + $0x14] sm:$0xff]
      %v1690 = vld [vmem:[%s165 + $0x1c] sm:$0xff]
      %v1691 = vld [vmem:[%s165 + $0x24] sm:$0xff]
      %v1692 = vld [vmem:[%s165 + $0x2c] sm:$0xf]
      %v1693 = vld [vmem:[%s165 + $0x44] sm:$0xff]
      %v1694 = vld [vmem:[%s165 + $0x4c] sm:$0xff]
      %v1695 = vld [vmem:[%s165 + $0x54] sm:$0xff]
      %v1696 = vld [vmem:[%s165 + $0x5c] sm:$0xf]
      %1705 = vrot.lane.b32.xlu0 %v1689, 117
      %v1706 = vpop.permute.xlu0 %1705
      %1707 = vrot.lane.b32.xlu0 %v1690, 117
      %v1708 = vpop.permute.xlu0 %1707
      %1709 = vrot.lane.b32.xlu0 %v1691, 117
      %v1710 = vpop.permute.xlu0 %1709
      %1711 = vrot.lane.b32.xlu0 %v1692, 117
      %v1712 = vpop.permute.xlu0 %1711
      %1713 = vrot.lane.b32.xlu0 %v1693, 117
      %v1714 = vpop.permute.xlu0 %1713
      %1715 = vrot.lane.b32.xlu0 %v1694, 117
      %v1716 = vpop.permute.xlu0 %1715
      %1717 = vrot.lane.b32.xlu0 %v1695, 117
      %v1718 = vpop.permute.xlu0 %1717
      %1719 = vrot.lane.b32.xlu0 %v1696, 117
      %v1720 = vpop.permute.xlu0 %1719
      %v1721 = vrot.slane %v1706, 4
      %v1722 = vrot.slane %v1708, 4
      %v1723 = vrot.slane %v1710, 4
      %v1724 = vrot.slane %v1712, 4
      %v1725 = vrot.slane %v1714, 4
      %v1726 = vrot.slane %v1716, 4
      %v1727 = vrot.slane %v1718, 4
      %v1728 = vrot.slane %v1720, 4
      %v1729 = vsel %vm212, %v1721, %v1722
      %v1730 = vsel %vm681, %v1706, %v1729
      %v1731 = vsel %vm212, %v1722, %v1723
      %v1732 = vsel %vm681, %v1708, %v1731
      %v1733 = vsel %vm212, %v1723, %v1724
      %v1734 = vsel %vm681, %v1710, %v1733
      %v1735 = vsel %vm212, %v1725, %v1726
      %v1736 = vsel %vm681, %v1714, %v1735
      %v1737 = vsel %vm212, %v1726, %v1727
      %v1738 = vsel %vm681, %v1716, %v1737
      %v1739 = vsel %vm212, %v1727, %v1728
      %v1740 = vsel %vm681, %v1718, %v1739
      %1747 = vst [vmem:[#allocation2 + $0x4e0] sm:$0xff] %v1730
      %1748 = vst [vmem:[#allocation2 + $0x4e8] sm:$0xff] %v1732
      %1749 = vst [vmem:[#allocation2 + $0x4f0] sm:$0xff] %v1734
      %1750 = vst [vmem:[#allocation2 + $0x4f8] sm:$0xff] %v1736
      %1751 = vst [vmem:[#allocation2 + $0x500] sm:$0xff] %v1738
      %1752 = vst [vmem:[#allocation2 + $0x508] sm:$0xff] %v1740
      %v1753 = vld [vmem:[%s1] sm:$0xff]
      %v1754 = vld [vmem:[%s1 + $0x8] sm:$0xff]
      %v1755 = vld [vmem:[#allocation2] sm:$0xff]
      %v1756 = vld [vmem:[#allocation2 + $0x8] sm:$0xff]
      %v1757 = vld [vmem:[#allocation2 + $0x10] sm:$0xff]
      %v1758 = vld [vmem:[#allocation2 + $0x18] sm:$0xff]
      %v1759 = vld [vmem:[#allocation2 + $0x20] sm:$0xff]
      %v1760 = vld [vmem:[#allocation2 + $0x28] sm:$0xff]
      %v1761 = vld [vmem:[#allocation2 + $0x30] sm:$0xff]
      %v1762 = vld [vmem:[#allocation2 + $0x38] sm:$0xff]
      %v1763 = vld [vmem:[#allocation2 + $0x40] sm:$0xff]
      %v1764 = vld [vmem:[#allocation2 + $0x48] sm:$0xff]
      %v1765 = vld [vmem:[#allocation2 + $0x50] sm:$0xff]
      %v1766 = vld [vmem:[#allocation2 + $0x58] sm:$0xff]
      %v1767 = vld [vmem:[#allocation2 + $0x60] sm:$0xff]
      %v1768 = vld [vmem:[#allocation2 + $0x68] sm:$0xff]
      %v1769 = vld [vmem:[#allocation2 + $0x70] sm:$0xff]
      %v1770 = vld [vmem:[#allocation2 + $0x78] sm:$0xff]
      %v1771 = vld [vmem:[#allocation2 + $0x80] sm:$0xff]
      %v1772 = vld [vmem:[#allocation2 + $0x88] sm:$0xff]
      %v1773 = vld [vmem:[#allocation2 + $0x90] sm:$0xff]
      %v1774 = vld [vmem:[#allocation2 + $0x98] sm:$0xff]
      %v1775 = vld [vmem:[#allocation2 + $0xa0] sm:$0xff]
      %v1776 = vld [vmem:[#allocation2 + $0xa8] sm:$0xff]
      %v1777 = vld [vmem:[#allocation2 + $0xb0] sm:$0xff]
      %v1778 = vld [vmem:[#allocation2 + $0xb8] sm:$0xff]
      %v1779 = vld [vmem:[#allocation2 + $0xc0] sm:$0xff]
      %v1780 = vld [vmem:[#allocation2 + $0xc8] sm:$0xff]
      %v1781 = vld [vmem:[#allocation2 + $0xd0] sm:$0xff]
      %v1782 = vld [vmem:[#allocation2 + $0xd8] sm:$0xff]
      %v1783 = vld [vmem:[#allocation2 + $0xe0] sm:$0xff]
      %v1784 = vld [vmem:[#allocation2 + $0xe8] sm:$0xff]
      %v1785 = vld [vmem:[#allocation2 + $0xf0] sm:$0xff]
      %v1786 = vld [vmem:[#allocation2 + $0xf8] sm:$0xff]
      %v1787 = vld [vmem:[#allocation2 + $0x100] sm:$0xff]
      %v1788 = vld [vmem:[#allocation2 + $0x108] sm:$0xff]
      %v1789 = vld [vmem:[#allocation2 + $0x110] sm:$0xff]
      %v1790 = vld [vmem:[#allocation2 + $0x118] sm:$0xff]
      %v1791 = vld [vmem:[#allocation2 + $0x120] sm:$0xff]
      %v1792 = vld [vmem:[#allocation2 + $0x128] sm:$0xff]
      %v1793 = vld [vmem:[#allocation2 + $0x130] sm:$0xff]
      %v1794 = vld [vmem:[#allocation2 + $0x138] sm:$0xff]
      %v1795 = vld [vmem:[#allocation2 + $0x140] sm:$0xff]
      %v1796 = vld [vmem:[#allocation2 + $0x148] sm:$0xff]
      %v1797 = vld [vmem:[#allocation2 + $0x150] sm:$0xff]
      %v1798 = vld [vmem:[#allocation2 + $0x158] sm:$0xff]
      %v1799 = vld [vmem:[#allocation2 + $0x160] sm:$0xff]
      %v1800 = vld [vmem:[#allocation2 + $0x168] sm:$0xff]
      %v1801 = vld [vmem:[#allocation2 + $0x170] sm:$0xff]
      %v1802 = vld [vmem:[#allocation2 + $0x178] sm:$0xff]
      %v1803 = vld [vmem:[#allocation2 + $0x180] sm:$0xff]
      %v1804 = vld [vmem:[#allocation2 + $0x188] sm:$0xff]
      %v1805 = vld [vmem:[#allocation2 + $0x190] sm:$0xff]
      %v1806 = vld [vmem:[#allocation2 + $0x198] sm:$0xff]
      %v1807 = vld [vmem:[#allocation2 + $0x1a0] sm:$0xff]
      %v1808 = vld [vmem:[#allocation2 + $0x1a8] sm:$0xff]
      %v1809 = vld [vmem:[#allocation2 + $0x1b0] sm:$0xff]
      %v1810 = vld [vmem:[#allocation2 + $0x1b8] sm:$0xff]
      %v1811 = vld [vmem:[#allocation2 + $0x1c0] sm:$0xff]
      %v1812 = vld [vmem:[#allocation2 + $0x1c8] sm:$0xff]
      %v1813 = vld [vmem:[#allocation2 + $0x1d0] sm:$0xff]
      %v1814 = vld [vmem:[#allocation2 + $0x1d8] sm:$0xff]
      %v1815 = vld [vmem:[#allocation2 + $0x1e0] sm:$0xff]
      %v1816 = vld [vmem:[#allocation2 + $0x1e8] sm:$0xff]
      %v1817 = vld [vmem:[#allocation2 + $0x1f0] sm:$0xff]
      %v1818 = vld [vmem:[#allocation2 + $0x1f8] sm:$0xff]
      %v1819 = vld [vmem:[#allocation2 + $0x200] sm:$0xff]
      %v1820 = vld [vmem:[#allocation2 + $0x208] sm:$0xff]
      %v1821 = vld [vmem:[#allocation2 + $0x210] sm:$0xff]
      %v1822 = vld [vmem:[#allocation2 + $0x218] sm:$0xff]
      %v1823 = vld [vmem:[#allocation2 + $0x220] sm:$0xff]
      %v1824 = vld [vmem:[#allocation2 + $0x228] sm:$0xff]
      %v1825 = vld [vmem:[#allocation2 + $0x230] sm:$0xff]
      %v1826 = vld [vmem:[#allocation2 + $0x238] sm:$0xff]
      %v1827 = vld [vmem:[#allocation2 + $0x240] sm:$0xff]
      %v1828 = vld [vmem:[#allocation2 + $0x248] sm:$0xff]
      %v1829 = vld [vmem:[#allocation2 + $0x250] sm:$0xff]
      %v1830 = vld [vmem:[#allocation2 + $0x258] sm:$0xff]
      %v1831 = vld [vmem:[#allocation2 + $0x260] sm:$0xff]
      %v1832 = vld [vmem:[#allocation2 + $0x268] sm:$0xff]
      %v1833 = vld [vmem:[#allocation2 + $0x270] sm:$0xff]
      %v1834 = vld [vmem:[#allocation2 + $0x278] sm:$0xff]
      %v1835 = vld [vmem:[#allocation2 + $0x280] sm:$0xff]
      %v1836 = vld [vmem:[#allocation2 + $0x288] sm:$0xff]
      %v1837 = vld [vmem:[#allocation2 + $0x290] sm:$0xff]
      %v1838 = vld [vmem:[#allocation2 + $0x298] sm:$0xff]
      %v1839 = vld [vmem:[#allocation2 + $0x2a0] sm:$0xff]
      %v1840 = vld [vmem:[#allocation2 + $0x2a8] sm:$0xff]
      %v1841 = vld [vmem:[#allocation2 + $0x2b0] sm:$0xff]
      %v1842 = vld [vmem:[#allocation2 + $0x2b8] sm:$0xff]
      %v1843 = vld [vmem:[#allocation2 + $0x2c0] sm:$0xff]
      %v1844 = vld [vmem:[#allocation2 + $0x2c8] sm:$0xff]
      %v1845 = vld [vmem:[#allocation2 + $0x2d0] sm:$0xff]
      %v1846 = vld [vmem:[#allocation2 + $0x2d8] sm:$0xff]
      %v1847 = vld [vmem:[#allocation2 + $0x2e0] sm:$0xff]
      %v1848 = vld [vmem:[#allocation2 + $0x2e8] sm:$0xff]
      %v1849 = vld [vmem:[#allocation2 + $0x2f0] sm:$0xff]
      %v1850 = vld [vmem:[#allocation2 + $0x2f8] sm:$0xff]
      %v1851 = vld [vmem:[#allocation2 + $0x300] sm:$0xff]
      %v1852 = vld [vmem:[#allocation2 + $0x308] sm:$0xff]
      %v1853 = vld [vmem:[#allocation2 + $0x310] sm:$0xff]
      %v1854 = vld [vmem:[#allocation2 + $0x318] sm:$0xff]
      %v1855 = vld [vmem:[#allocation2 + $0x320] sm:$0xff]
      %v1856 = vld [vmem:[#allocation2 + $0x328] sm:$0xff]
      %v1857 = vld [vmem:[#allocation2 + $0x330] sm:$0xff]
      %v1858 = vld [vmem:[#allocation2 + $0x338] sm:$0xff]
      %v1859 = vld [vmem:[#allocation2 + $0x340] sm:$0xff]
      %v1860 = vld [vmem:[#allocation2 + $0x348] sm:$0xff]
      %v1861 = vld [vmem:[#allocation2 + $0x350] sm:$0xff]
      %v1862 = vld [vmem:[#allocation2 + $0x358] sm:$0xff]
      %v1863 = vld [vmem:[#allocation2 + $0x360] sm:$0xff]
      %v1864 = vld [vmem:[#allocation2 + $0x368] sm:$0xff]
      %v1865 = vld [vmem:[#allocation2 + $0x370] sm:$0xff]
      %v1866 = vld [vmem:[#allocation2 + $0x378] sm:$0xff]
      %v1867 = vld [vmem:[#allocation2 + $0x380] sm:$0xff]
      %v1868 = vld [vmem:[#allocation2 + $0x388] sm:$0xff]
      %v1869 = vld [vmem:[#allocation2 + $0x390] sm:$0xff]
      %v1870 = vld [vmem:[#allocation2 + $0x398] sm:$0xff]
      %v1871 = vld [vmem:[#allocation2 + $0x3a0] sm:$0xff]
      %v1872 = vld [vmem:[#allocation2 + $0x3a8] sm:$0xff]
      %v1873 = vld [vmem:[#allocation2 + $0x3b0] sm:$0xff]
      %v1874 = vld [vmem:[#allocation2 + $0x3b8] sm:$0xff]
      %v1875 = vld [vmem:[#allocation2 + $0x3c0] sm:$0xff]
      %v1876 = vld [vmem:[#allocation2 + $0x3c8] sm:$0xff]
      %v1877 = vld [vmem:[#allocation2 + $0x3d0] sm:$0xff]
      %v1878 = vld [vmem:[#allocation2 + $0x3d8] sm:$0xff]
      %v1879 = vld [vmem:[#allocation2 + $0x3e0] sm:$0xff]
      %v1880 = vld [vmem:[#allocation2 + $0x3e8] sm:$0xff]
      %v1881 = vld [vmem:[#allocation2 + $0x3f0] sm:$0xff]
      %v1882 = vld [vmem:[#allocation2 + $0x3f8] sm:$0xff]
      %v1883 = vld [vmem:[#allocation2 + $0x400] sm:$0xff]
      %v1884 = vld [vmem:[#allocation2 + $0x408] sm:$0xff]
      %v1885 = vld [vmem:[#allocation2 + $0x410] sm:$0xff]
      %v1886 = vld [vmem:[#allocation2 + $0x418] sm:$0xff]
      %v1887 = vld [vmem:[#allocation2 + $0x420] sm:$0xff]
      %v1888 = vld [vmem:[#allocation2 + $0x428] sm:$0xff]
      %v1889 = vld [vmem:[#allocation2 + $0x430] sm:$0xff]
      %v1890 = vld [vmem:[#allocation2 + $0x438] sm:$0xff]
      %v1891 = vld [vmem:[#allocation2 + $0x440] sm:$0xff]
      %v1892 = vld [vmem:[#allocation2 + $0x448] sm:$0xff]
      %v1893 = vld [vmem:[#allocation2 + $0x450] sm:$0xff]
      %v1894 = vld [vmem:[#allocation2 + $0x458] sm:$0xff]
      %v1895 = vld [vmem:[#allocation2 + $0x460] sm:$0xff]
      %v1896 = vld [vmem:[#allocation2 + $0x468] sm:$0xff]
      %v1897 = vld [vmem:[#allocation2 + $0x470] sm:$0xff]
      %v1898 = vld [vmem:[#allocation2 + $0x478] sm:$0xff]
      %v1899 = vld [vmem:[#allocation2 + $0x480] sm:$0xff]
      %v1900 = vld [vmem:[#allocation2 + $0x488] sm:$0xff]
      %v1901 = vld [vmem:[#allocation2 + $0x490] sm:$0xff]
      %v1902 = vld [vmem:[#allocation2 + $0x498] sm:$0xff]
      %v1903 = vld [vmem:[#allocation2 + $0x4a0] sm:$0xff]
      %v1904 = vld [vmem:[#allocation2 + $0x4a8] sm:$0xff]
      %v1905 = vld [vmem:[#allocation2 + $0x4b0] sm:$0xff]
      %v1906 = vld [vmem:[#allocation2 + $0x4b8] sm:$0xff]
      %v1907 = vld [vmem:[#allocation2 + $0x4c0] sm:$0xff]
      %v1908 = vld [vmem:[#allocation2 + $0x4c8] sm:$0xff]
      %v1909 = vld [vmem:[#allocation2 + $0x4d0] sm:$0xff]
      %v1910 = vld [vmem:[#allocation2 + $0x4d8] sm:$0xff]
      %v1911 = vld [vmem:[#allocation2 + $0x4e0] sm:$0xff]
      %v1912 = vld [vmem:[#allocation2 + $0x4e8] sm:$0xff]
      %v1913 = vld [vmem:[#allocation2 + $0x4f0] sm:$0xff]
      %v1914 = vld [vmem:[#allocation2 + $0x4f8] sm:$0xff]
      %v1915 = vld [vmem:[#allocation2 + $0x500] sm:$0xff]
      %v1916 = vld [vmem:[#allocation2 + $0x508] sm:$0xff]
      %v1917 = vld [vmem:[%s2] sm:$0xff]
      %1919 = vset.pattern.permute.xlu0 0
      %1920 = vperm.xlu0 %1919, %v1917
      %v1921 = vpop.permute.xlu0 %1920
      %v1925 = vunpack.c.l.b16 %v1753
      %v1926 = vunpack.c.h.b16 %v1753
      %v1927 = vunpack.c.l.b16 %v1754
      %v1928 = vunpack.c.h.b16 %v1754
      %v1929 = vpack.c.b16 %v1925, %v1925
      %v1930 = vpack.c.b16 %v1926, %v1926
      %v1931 = vpack.c.b16 %v1927, %v1927
      %v1932 = vpack.c.b16 %v1928, %v1928
      %v2098 = vunpack.c.l.b16 %v1755
      %v2099 = vunpack.c.h.b16 %v1755
      %v2100 = vunpack.c.l.b16 %v1756
      %v2101 = vunpack.c.h.b16 %v1756
      %v2102 = vunpack.c.l.b16 %v1757
      %v2103 = vunpack.c.h.b16 %v1757
      %v2104 = vunpack.c.l.b16 %v1758
      %v2105 = vunpack.c.h.b16 %v1758
      %v2106 = vunpack.c.l.b16 %v1759
      %v2107 = vunpack.c.h.b16 %v1759
      %v2108 = vunpack.c.l.b16 %v1760
      %v2109 = vunpack.c.h.b16 %v1760
      %v2110 = vunpack.c.l.b16 %v1761
      %v2111 = vunpack.c.h.b16 %v1761
      %v2112 = vunpack.c.l.b16 %v1762
      %v2113 = vunpack.c.h.b16 %v1762
      %v2114 = vunpack.c.l.b16 %v1763
      %v2115 = vunpack.c.h.b16 %v1763
      %v2116 = vunpack.c.l.b16 %v1764
      %v2117 = vunpack.c.h.b16 %v1764
      %v2118 = vunpack.c.l.b16 %v1765
      %v2119 = vunpack.c.h.b16 %v1765
      %v2120 = vunpack.c.l.b16 %v1766
      %v2121 = vunpack.c.h.b16 %v1766
      %v2122 = vunpack.c.l.b16 %v1767
      %v2123 = vunpack.c.h.b16 %v1767
      %v2124 = vunpack.c.l.b16 %v1768
      %v2125 = vunpack.c.h.b16 %v1768
      %v2126 = vunpack.c.l.b16 %v1769
      %v2127 = vunpack.c.h.b16 %v1769
      %v2128 = vunpack.c.l.b16 %v1770
      %v2129 = vunpack.c.h.b16 %v1770
      %v2130 = vunpack.c.l.b16 %v1771
      %v2131 = vunpack.c.h.b16 %v1771
      %v2132 = vunpack.c.l.b16 %v1772
      %v2133 = vunpack.c.h.b16 %v1772
      %v2134 = vunpack.c.l.b16 %v1773
      %v2135 = vunpack.c.h.b16 %v1773
      %v2136 = vunpack.c.l.b16 %v1774
      %v2137 = vunpack.c.h.b16 %v1774
      %v2138 = vunpack.c.l.b16 %v1775
      %v2139 = vunpack.c.h.b16 %v1775
      %v2140 = vunpack.c.l.b16 %v1776
      %v2141 = vunpack.c.h.b16 %v1776
      %v2142 = vunpack.c.l.b16 %v1777
      %v2143 = vunpack.c.h.b16 %v1777
      %v2144 = vunpack.c.l.b16 %v1778
      %v2145 = vunpack.c.h.b16 %v1778
      %v2146 = vunpack.c.l.b16 %v1779
      %v2147 = vunpack.c.h.b16 %v1779
      %v2148 = vunpack.c.l.b16 %v1780
      %v2149 = vunpack.c.h.b16 %v1780
      %v2150 = vunpack.c.l.b16 %v1781
      %v2151 = vunpack.c.h.b16 %v1781
      %v2152 = vunpack.c.l.b16 %v1782
      %v2153 = vunpack.c.h.b16 %v1782
      %v2154 = vunpack.c.l.b16 %v1783
      %v2155 = vunpack.c.h.b16 %v1783
      %v2156 = vunpack.c.l.b16 %v1784
      %v2157 = vunpack.c.h.b16 %v1784
      %v2158 = vunpack.c.l.b16 %v1785
      %v2159 = vunpack.c.h.b16 %v1785
      %v2160 = vunpack.c.l.b16 %v1786
      %v2161 = vunpack.c.h.b16 %v1786
      %v2162 = vunpack.c.l.b16 %v1787
      %v2163 = vunpack.c.h.b16 %v1787
      %v2164 = vunpack.c.l.b16 %v1788
      %v2165 = vunpack.c.h.b16 %v1788
      %v2166 = vunpack.c.l.b16 %v1789
      %v2167 = vunpack.c.h.b16 %v1789
      %v2168 = vunpack.c.l.b16 %v1790
      %v2169 = vunpack.c.h.b16 %v1790
      %v2170 = vunpack.c.l.b16 %v1791
      %v2171 = vunpack.c.h.b16 %v1791
      %v2172 = vunpack.c.l.b16 %v1792
      %v2173 = vunpack.c.h.b16 %v1792
      %v2174 = vunpack.c.l.b16 %v1793
      %v2175 = vunpack.c.h.b16 %v1793
      %v2176 = vunpack.c.l.b16 %v1794
      %v2177 = vunpack.c.h.b16 %v1794
      %v2178 = vunpack.c.l.b16 %v1795
      %v2179 = vunpack.c.h.b16 %v1795
      %v2180 = vunpack.c.l.b16 %v1796
      %v2181 = vunpack.c.h.b16 %v1796
      %v2182 = vunpack.c.l.b16 %v1797
      %v2183 = vunpack.c.h.b16 %v1797
      %v2184 = vunpack.c.l.b16 %v1798
      %v2185 = vunpack.c.h.b16 %v1798
      %v2186 = vunpack.c.l.b16 %v1799
      %v2187 = vunpack.c.h.b16 %v1799
      %v2188 = vunpack.c.l.b16 %v1800
      %v2189 = vunpack.c.h.b16 %v1800
      %v2190 = vunpack.c.l.b16 %v1801
      %v2191 = vunpack.c.h.b16 %v1801
      %v2192 = vunpack.c.l.b16 %v1802
      %v2193 = vunpack.c.h.b16 %v1802
      %v2194 = vunpack.c.l.b16 %v1803
      %v2195 = vunpack.c.h.b16 %v1803
      %v2196 = vunpack.c.l.b16 %v1804
      %v2197 = vunpack.c.h.b16 %v1804
      %v2198 = vunpack.c.l.b16 %v1805
      %v2199 = vunpack.c.h.b16 %v1805
      %v2200 = vunpack.c.l.b16 %v1806
      %v2201 = vunpack.c.h.b16 %v1806
      %v2202 = vunpack.c.l.b16 %v1807
      %v2203 = vunpack.c.h.b16 %v1807
      %v2204 = vunpack.c.l.b16 %v1808
      %v2205 = vunpack.c.h.b16 %v1808
      %v2206 = vunpack.c.l.b16 %v1809
      %v2207 = vunpack.c.h.b16 %v1809
      %v2208 = vunpack.c.l.b16 %v1810
      %v2209 = vunpack.c.h.b16 %v1810
      %v2210 = vunpack.c.l.b16 %v1811
      %v2211 = vunpack.c.h.b16 %v1811
      %v2212 = vunpack.c.l.b16 %v1812
      %v2213 = vunpack.c.h.b16 %v1812
      %v2214 = vunpack.c.l.b16 %v1813
      %v2215 = vunpack.c.h.b16 %v1813
      %v2216 = vunpack.c.l.b16 %v1814
      %v2217 = vunpack.c.h.b16 %v1814
      %v2218 = vunpack.c.l.b16 %v1815
      %v2219 = vunpack.c.h.b16 %v1815
      %v2220 = vunpack.c.l.b16 %v1816
      %v2221 = vunpack.c.h.b16 %v1816
      %v2222 = vunpack.c.l.b16 %v1817
      %v2223 = vunpack.c.h.b16 %v1817
      %v2224 = vunpack.c.l.b16 %v1818
      %v2225 = vunpack.c.h.b16 %v1818
      %v2226 = vunpack.c.l.b16 %v1819
      %v2227 = vunpack.c.h.b16 %v1819
      %v2228 = vunpack.c.l.b16 %v1820
      %v2229 = vunpack.c.h.b16 %v1820
      %v2230 = vunpack.c.l.b16 %v1821
      %v2231 = vunpack.c.h.b16 %v1821
      %v2232 = vunpack.c.l.b16 %v1822
      %v2233 = vunpack.c.h.b16 %v1822
      %v2234 = vunpack.c.l.b16 %v1823
      %v2235 = vunpack.c.h.b16 %v1823
      %v2236 = vunpack.c.l.b16 %v1824
      %v2237 = vunpack.c.h.b16 %v1824
      %v2238 = vunpack.c.l.b16 %v1825
      %v2239 = vunpack.c.h.b16 %v1825
      %v2240 = vunpack.c.l.b16 %v1826
      %v2241 = vunpack.c.h.b16 %v1826
      %v2242 = vunpack.c.l.b16 %v1827
      %v2243 = vunpack.c.h.b16 %v1827
      %v2244 = vunpack.c.l.b16 %v1828
      %v2245 = vunpack.c.h.b16 %v1828
      %v2246 = vunpack.c.l.b16 %v1829
      %v2247 = vunpack.c.h.b16 %v1829
      %v2248 = vunpack.c.l.b16 %v1830
      %v2249 = vunpack.c.h.b16 %v1830
      %v2250 = vunpack.c.l.b16 %v1831
      %v2251 = vunpack.c.h.b16 %v1831
      %v2252 = vunpack.c.l.b16 %v1832
      %v2253 = vunpack.c.h.b16 %v1832
      %v2254 = vunpack.c.l.b16 %v1833
      %v2255 = vunpack.c.h.b16 %v1833
      %v2256 = vunpack.c.l.b16 %v1834
      %v2257 = vunpack.c.h.b16 %v1834
      %v2258 = vunpack.c.l.b16 %v1835
      %v2259 = vunpack.c.h.b16 %v1835
      %v2260 = vunpack.c.l.b16 %v1836
      %v2261 = vunpack.c.h.b16 %v1836
      %v2262 = vunpack.c.l.b16 %v1837
      %v2263 = vunpack.c.h.b16 %v1837
      %v2264 = vunpack.c.l.b16 %v1838
      %v2265 = vunpack.c.h.b16 %v1838
      %v2266 = vunpack.c.l.b16 %v1839
      %v2267 = vunpack.c.h.b16 %v1839
      %v2268 = vunpack.c.l.b16 %v1840
      %v2269 = vunpack.c.h.b16 %v1840
      %v2270 = vunpack.c.l.b16 %v1841
      %v2271 = vunpack.c.h.b16 %v1841
      %v2272 = vunpack.c.l.b16 %v1842
      %v2273 = vunpack.c.h.b16 %v1842
      %v2274 = vunpack.c.l.b16 %v1843
      %v2275 = vunpack.c.h.b16 %v1843
      %v2276 = vunpack.c.l.b16 %v1844
      %v2277 = vunpack.c.h.b16 %v1844
      %v2278 = vunpack.c.l.b16 %v1845
      %v2279 = vunpack.c.h.b16 %v1845
      %v2280 = vunpack.c.l.b16 %v1846
      %v2281 = vunpack.c.h.b16 %v1846
      %v2282 = vunpack.c.l.b16 %v1847
      %v2283 = vunpack.c.h.b16 %v1847
      %v2284 = vunpack.c.l.b16 %v1848
      %v2285 = vunpack.c.h.b16 %v1848
      %v2286 = vunpack.c.l.b16 %v1849
      %v2287 = vunpack.c.h.b16 %v1849
      %v2288 = vunpack.c.l.b16 %v1850
      %v2289 = vunpack.c.h.b16 %v1850
      %v2290 = vunpack.c.l.b16 %v1851
      %v2291 = vunpack.c.h.b16 %v1851
      %v2292 = vunpack.c.l.b16 %v1852
      %v2293 = vunpack.c.h.b16 %v1852
      %v2294 = vunpack.c.l.b16 %v1853
      %v2295 = vunpack.c.h.b16 %v1853
      %v2296 = vunpack.c.l.b16 %v1854
      %v2297 = vunpack.c.h.b16 %v1854
      %v2298 = vunpack.c.l.b16 %v1855
      %v2299 = vunpack.c.h.b16 %v1855
      %v2300 = vunpack.c.l.b16 %v1856
      %v2301 = vunpack.c.h.b16 %v1856
      %v2302 = vunpack.c.l.b16 %v1857
      %v2303 = vunpack.c.h.b16 %v1857
      %v2304 = vunpack.c.l.b16 %v1858
      %v2305 = vunpack.c.h.b16 %v1858
      %v2306 = vunpack.c.l.b16 %v1859
      %v2307 = vunpack.c.h.b16 %v1859
      %v2308 = vunpack.c.l.b16 %v1860
      %v2309 = vunpack.c.h.b16 %v1860
      %v2310 = vunpack.c.l.b16 %v1861
      %v2311 = vunpack.c.h.b16 %v1861
      %v2312 = vunpack.c.l.b16 %v1862
      %v2313 = vunpack.c.h.b16 %v1862
      %v2314 = vunpack.c.l.b16 %v1863
      %v2315 = vunpack.c.h.b16 %v1863
      %v2316 = vunpack.c.l.b16 %v1864
      %v2317 = vunpack.c.h.b16 %v1864
      %v2318 = vunpack.c.l.b16 %v1865
      %v2319 = vunpack.c.h.b16 %v1865
      %v2320 = vunpack.c.l.b16 %v1866
      %v2321 = vunpack.c.h.b16 %v1866
      %v2322 = vunpack.c.l.b16 %v1867
      %v2323 = vunpack.c.h.b16 %v1867
      %v2324 = vunpack.c.l.b16 %v1868
      %v2325 = vunpack.c.h.b16 %v1868
      %v2326 = vunpack.c.l.b16 %v1869
      %v2327 = vunpack.c.h.b16 %v1869
      %v2328 = vunpack.c.l.b16 %v1870
      %v2329 = vunpack.c.h.b16 %v1870
      %v2330 = vunpack.c.l.b16 %v1871
      %v2331 = vunpack.c.h.b16 %v1871
      %v2332 = vunpack.c.l.b16 %v1872
      %v2333 = vunpack.c.h.b16 %v1872
      %v2334 = vunpack.c.l.b16 %v1873
      %v2335 = vunpack.c.h.b16 %v1873
      %v2336 = vunpack.c.l.b16 %v1874
      %v2337 = vunpack.c.h.b16 %v1874
      %v2338 = vunpack.c.l.b16 %v1875
      %v2339 = vunpack.c.h.b16 %v1875
      %v2340 = vunpack.c.l.b16 %v1876
      %v2341 = vunpack.c.h.b16 %v1876
      %v2342 = vunpack.c.l.b16 %v1877
      %v2343 = vunpack.c.h.b16 %v1877
      %v2344 = vunpack.c.l.b16 %v1878
      %v2345 = vunpack.c.h.b16 %v1878
      %v2346 = vunpack.c.l.b16 %v1879
      %v2347 = vunpack.c.h.b16 %v1879
      %v2348 = vunpack.c.l.b16 %v1880
      %v2349 = vunpack.c.h.b16 %v1880
      %v2350 = vunpack.c.l.b16 %v1881
      %v2351 = vunpack.c.h.b16 %v1881
      %v2352 = vunpack.c.l.b16 %v1882
      %v2353 = vunpack.c.h.b16 %v1882
      %v2354 = vunpack.c.l.b16 %v1883
      %v2355 = vunpack.c.h.b16 %v1883
      %v2356 = vunpack.c.l.b16 %v1884
      %v2357 = vunpack.c.h.b16 %v1884
      %v2358 = vunpack.c.l.b16 %v1885
      %v2359 = vunpack.c.h.b16 %v1885
      %v2360 = vunpack.c.l.b16 %v1886
      %v2361 = vunpack.c.h.b16 %v1886
      %v2362 = vunpack.c.l.b16 %v1887
      %v2363 = vunpack.c.h.b16 %v1887
      %v2364 = vunpack.c.l.b16 %v1888
      %v2365 = vunpack.c.h.b16 %v1888
      %v2366 = vunpack.c.l.b16 %v1889
      %v2367 = vunpack.c.h.b16 %v1889
      %v2368 = vunpack.c.l.b16 %v1890
      %v2369 = vunpack.c.h.b16 %v1890
      %v2370 = vunpack.c.l.b16 %v1891
      %v2371 = vunpack.c.h.b16 %v1891
      %v2372 = vunpack.c.l.b16 %v1892
      %v2373 = vunpack.c.h.b16 %v1892
      %v2374 = vunpack.c.l.b16 %v1893
      %v2375 = vunpack.c.h.b16 %v1893
      %v2376 = vunpack.c.l.b16 %v1894
      %v2377 = vunpack.c.h.b16 %v1894
      %v2378 = vunpack.c.l.b16 %v1895
      %v2379 = vunpack.c.h.b16 %v1895
      %v2380 = vunpack.c.l.b16 %v1896
      %v2381 = vunpack.c.h.b16 %v1896
      %v2382 = vunpack.c.l.b16 %v1897
      %v2383 = vunpack.c.h.b16 %v1897
      %v2384 = vunpack.c.l.b16 %v1898
      %v2385 = vunpack.c.h.b16 %v1898
      %v2386 = vunpack.c.l.b16 %v1899
      %v2387 = vunpack.c.h.b16 %v1899
      %v2388 = vunpack.c.l.b16 %v1900
      %v2389 = vunpack.c.h.b16 %v1900
      %v2390 = vunpack.c.l.b16 %v1901
      %v2391 = vunpack.c.h.b16 %v1901
      %v2392 = vunpack.c.l.b16 %v1902
      %v2393 = vunpack.c.h.b16 %v1902
      %v2394 = vunpack.c.l.b16 %v1903
      %v2395 = vunpack.c.h.b16 %v1903
      %v2396 = vunpack.c.l.b16 %v1904
      %v2397 = vunpack.c.h.b16 %v1904
      %v2398 = vunpack.c.l.b16 %v1905
      %v2399 = vunpack.c.h.b16 %v1905
      %v2400 = vunpack.c.l.b16 %v1906
      %v2401 = vunpack.c.h.b16 %v1906
      %v2402 = vunpack.c.l.b16 %v1907
      %v2403 = vunpack.c.h.b16 %v1907
      %v2404 = vunpack.c.l.b16 %v1908
      %v2405 = vunpack.c.h.b16 %v1908
      %v2406 = vunpack.c.l.b16 %v1909
      %v2407 = vunpack.c.h.b16 %v1909
      %v2408 = vunpack.c.l.b16 %v1910
      %v2409 = vunpack.c.h.b16 %v1910
      %v2410 = vunpack.c.l.b16 %v1911
      %v2411 = vunpack.c.h.b16 %v1911
      %v2412 = vunpack.c.l.b16 %v1912
      %v2413 = vunpack.c.h.b16 %v1912
      %v2414 = vunpack.c.l.b16 %v1913
      %v2415 = vunpack.c.h.b16 %v1913
      %v2416 = vunpack.c.l.b16 %v1914
      %v2417 = vunpack.c.h.b16 %v1914
      %v2418 = vunpack.c.l.b16 %v1915
      %v2419 = vunpack.c.h.b16 %v1915
      %v2420 = vunpack.c.l.b16 %v1916
      %v2421 = vunpack.c.h.b16 %v1916
      %v2422 = vpack.c.b16 %v2104, %v2098
      %v2423 = vpack.c.b16 %v2105, %v2099
      %v2424 = vpack.c.b16 %v2106, %v2100
      %v2425 = vpack.c.b16 %v2107, %v2101
      %v2426 = vpack.c.b16 %v2108, %v2102
      %v2427 = vpack.c.b16 %v2109, %v2103
      %v2428 = vpack.c.b16 %v2116, %v2110
      %v2429 = vpack.c.b16 %v2117, %v2111
      %v2430 = vpack.c.b16 %v2118, %v2112
      %v2431 = vpack.c.b16 %v2119, %v2113
      %v2432 = vpack.c.b16 %v2120, %v2114
      %v2433 = vpack.c.b16 %v2121, %v2115
      %v2434 = vpack.c.b16 %v2128, %v2122
      %v2435 = vpack.c.b16 %v2129, %v2123
      %v2436 = vpack.c.b16 %v2130, %v2124
      %v2437 = vpack.c.b16 %v2131, %v2125
      %v2438 = vpack.c.b16 %v2132, %v2126
      %v2439 = vpack.c.b16 %v2133, %v2127
      %v2440 = vpack.c.b16 %v2140, %v2134
      %v2441 = vpack.c.b16 %v2141, %v2135
      %v2442 = vpack.c.b16 %v2142, %v2136
      %v2443 = vpack.c.b16 %v2143, %v2137
      %v2444 = vpack.c.b16 %v2144, %v2138
      %v2445 = vpack.c.b16 %v2145, %v2139
      %v2446 = vpack.c.b16 %v2152, %v2146
      %v2447 = vpack.c.b16 %v2153, %v2147
      %v2448 = vpack.c.b16 %v2154, %v2148
      %v2449 = vpack.c.b16 %v2155, %v2149
      %v2450 = vpack.c.b16 %v2156, %v2150
      %v2451 = vpack.c.b16 %v2157, %v2151
      %v2452 = vpack.c.b16 %v2164, %v2158
      %v2453 = vpack.c.b16 %v2165, %v2159
      %v2454 = vpack.c.b16 %v2166, %v2160
      %v2455 = vpack.c.b16 %v2167, %v2161
      %v2456 = vpack.c.b16 %v2168, %v2162
      %v2457 = vpack.c.b16 %v2169, %v2163
      %v2458 = vpack.c.b16 %v2176, %v2170
      %v2459 = vpack.c.b16 %v2177, %v2171
      %v2460 = vpack.c.b16 %v2178, %v2172
      %v2461 = vpack.c.b16 %v2179, %v2173
      %v2462 = vpack.c.b16 %v2180, %v2174
      %v2463 = vpack.c.b16 %v2181, %v2175
      %v2464 = vpack.c.b16 %v2188, %v2182
      %v2465 = vpack.c.b16 %v2189, %v2183
      %v2466 = vpack.c.b16 %v2190, %v2184
      %v2467 = vpack.c.b16 %v2191, %v2185
      %v2468 = vpack.c.b16 %v2192, %v2186
      %v2469 = vpack.c.b16 %v2193, %v2187
      %v2470 = vpack.c.b16 %v2200, %v2194
      %v2471 = vpack.c.b16 %v2201, %v2195
      %v2472 = vpack.c.b16 %v2202, %v2196
      %v2473 = vpack.c.b16 %v2203, %v2197
      %v2474 = vpack.c.b16 %v2204, %v2198
      %v2475 = vpack.c.b16 %v2205, %v2199
      %v2476 = vpack.c.b16 %v2212, %v2206
      %v2477 = vpack.c.b16 %v2213, %v2207
      %v2478 = vpack.c.b16 %v2214, %v2208
      %v2479 = vpack.c.b16 %v2215, %v2209
      %v2480 = vpack.c.b16 %v2216, %v2210
      %v2481 = vpack.c.b16 %v2217, %v2211
      %v2482 = vpack.c.b16 %v2224, %v2218
      %v2483 = vpack.c.b16 %v2225, %v2219
      %v2484 = vpack.c.b16 %v2226, %v2220
      %v2485 = vpack.c.b16 %v2227, %v2221
      %v2486 = vpack.c.b16 %v2228, %v2222
      %v2487 = vpack.c.b16 %v2229, %v2223
      %v2488 = vpack.c.b16 %v2236, %v2230
      %v2489 = vpack.c.b16 %v2237, %v2231
      %v2490 = vpack.c.b16 %v2238, %v2232
      %v2491 = vpack.c.b16 %v2239, %v2233
      %v2492 = vpack.c.b16 %v2240, %v2234
      %v2493 = vpack.c.b16 %v2241, %v2235
      %v2494 = vpack.c.b16 %v2248, %v2242
      %v2495 = vpack.c.b16 %v2249, %v2243
      %v2496 = vpack.c.b16 %v2250, %v2244
      %v2497 = vpack.c.b16 %v2251, %v2245
      %v2498 = vpack.c.b16 %v2252, %v2246
      %v2499 = vpack.c.b16 %v2253, %v2247
      %v2500 = vpack.c.b16 %v2260, %v2254
      %v2501 = vpack.c.b16 %v2261, %v2255
      %v2502 = vpack.c.b16 %v2262, %v2256
      %v2503 = vpack.c.b16 %v2263, %v2257
      %v2504 = vpack.c.b16 %v2264, %v2258
      %v2505 = vpack.c.b16 %v2265, %v2259
      %v2506 = vpack.c.b16 %v2272, %v2266
      %v2507 = vpack.c.b16 %v2273, %v2267
      %v2508 = vpack.c.b16 %v2274, %v2268
      %v2509 = vpack.c.b16 %v2275, %v2269
      %v2510 = vpack.c.b16 %v2276, %v2270
      %v2511 = vpack.c.b16 %v2277, %v2271
      %v2512 = vpack.c.b16 %v2284, %v2278
      %v2513 = vpack.c.b16 %v2285, %v2279
      %v2514 = vpack.c.b16 %v2286, %v2280
      %v2515 = vpack.c.b16 %v2287, %v2281
      %v2516 = vpack.c.b16 %v2288, %v2282
      %v2517 = vpack.c.b16 %v2289, %v2283
      %v2518 = vpack.c.b16 %v2296, %v2290
      %v2519 = vpack.c.b16 %v2297, %v2291
      %v2520 = vpack.c.b16 %v2298, %v2292
      %v2521 = vpack.c.b16 %v2299, %v2293
      %v2522 = vpack.c.b16 %v2300, %v2294
      %v2523 = vpack.c.b16 %v2301, %v2295
      %v2524 = vpack.c.b16 %v2308, %v2302
      %v2525 = vpack.c.b16 %v2309, %v2303
      %v2526 = vpack.c.b16 %v2310, %v2304
      %v2527 = vpack.c.b16 %v2311, %v2305
      %v2528 = vpack.c.b16 %v2312, %v2306
      %v2529 = vpack.c.b16 %v2313, %v2307
      %v2530 = vpack.c.b16 %v2320, %v2314
      %v2531 = vpack.c.b16 %v2321, %v2315
      %v2532 = vpack.c.b16 %v2322, %v2316
      %v2533 = vpack.c.b16 %v2323, %v2317
      %v2534 = vpack.c.b16 %v2324, %v2318
      %v2535 = vpack.c.b16 %v2325, %v2319
      %v2536 = vpack.c.b16 %v2332, %v2326
      %v2537 = vpack.c.b16 %v2333, %v2327
      %v2538 = vpack.c.b16 %v2334, %v2328
      %v2539 = vpack.c.b16 %v2335, %v2329
      %v2540 = vpack.c.b16 %v2336, %v2330
      %v2541 = vpack.c.b16 %v2337, %v2331
      %v2542 = vpack.c.b16 %v2344, %v2338
      %v2543 = vpack.c.b16 %v2345, %v2339
      %v2544 = vpack.c.b16 %v2346, %v2340
      %v2545 = vpack.c.b16 %v2347, %v2341
      %v2546 = vpack.c.b16 %v2348, %v2342
      %v2547 = vpack.c.b16 %v2349, %v2343
      %v2548 = vpack.c.b16 %v2356, %v2350
      %v2549 = vpack.c.b16 %v2357, %v2351
      %v2550 = vpack.c.b16 %v2358, %v2352
      %v2551 = vpack.c.b16 %v2359, %v2353
      %v2552 = vpack.c.b16 %v2360, %v2354
      %v2553 = vpack.c.b16 %v2361, %v2355
      %v2554 = vpack.c.b16 %v2368, %v2362
      %v2555 = vpack.c.b16 %v2369, %v2363
      %v2556 = vpack.c.b16 %v2370, %v2364
      %v2557 = vpack.c.b16 %v2371, %v2365
      %v2558 = vpack.c.b16 %v2372, %v2366
      %v2559 = vpack.c.b16 %v2373, %v2367
      %v2560 = vpack.c.b16 %v2380, %v2374
      %v2561 = vpack.c.b16 %v2381, %v2375
      %v2562 = vpack.c.b16 %v2382, %v2376
      %v2563 = vpack.c.b16 %v2383, %v2377
      %v2564 = vpack.c.b16 %v2384, %v2378
      %v2565 = vpack.c.b16 %v2385, %v2379
      %v2566 = vpack.c.b16 %v2392, %v2386
      %v2567 = vpack.c.b16 %v2393, %v2387
      %v2568 = vpack.c.b16 %v2394, %v2388
      %v2569 = vpack.c.b16 %v2395, %v2389
      %v2570 = vpack.c.b16 %v2396, %v2390
      %v2571 = vpack.c.b16 %v2397, %v2391
      %v2572 = vpack.c.b16 %v2404, %v2398
      %v2573 = vpack.c.b16 %v2405, %v2399
      %v2574 = vpack.c.b16 %v2406, %v2400
      %v2575 = vpack.c.b16 %v2407, %v2401
      %v2576 = vpack.c.b16 %v2408, %v2402
      %v2577 = vpack.c.b16 %v2409, %v2403
      %v2578 = vpack.c.b16 %v2416, %v2410
      %v2579 = vpack.c.b16 %v2417, %v2411
      %v2580 = vpack.c.b16 %v2418, %v2412
      %v2581 = vpack.c.b16 %v2419, %v2413
      %v2582 = vpack.c.b16 %v2420, %v2414
      %v2583 = vpack.c.b16 %v2421, %v2415
      %vm2746 = vcmask 392192
      %v2748 = vsel %vm2746, %v1932, 0
      %2750 = vmatprep.subr.bf16.mxu0 %v2465
      %2751 = vmatpush1.bf16.msra.mxu0 %v2464
      %2752 = vmatprep.subr.bf16.mxu0 %v2459
      %2753 = vmatpush1.bf16.msra.mxu0 %v2458
      %2754 = vmatprep.subr.bf16.mxu0 %v2453
      %2755 = vmatpush1.bf16.msra.mxu0 %v2452
      %2756 = vmatprep.subr.bf16.mxu0 %v2447
      %2757 = vmatpush1.bf16.msra.mxu0 %v2446
      %2758 = vmatprep.subr.bf16.mxu0 %v2441
      %2759 = vmatpush1.bf16.msra.mxu0 %v2440
      %2760 = vmatprep.subr.bf16.mxu0 %v2435
      %2761 = vmatpush1.bf16.msra.mxu0 %v2434
      %2762 = vmatprep.subr.bf16.mxu0 %v2429
      %2763 = vmatpush1.bf16.msra.mxu0 %v2428
      %2764 = vmatprep.subr.bf16.mxu0 %v2423
      %2765 = vmatpush1.bf16.msra.mxu0 %v2422
      %2766 = vmatprep.subr.bf16.mxu0 %v2513
      %2767 = vmatpush2.bf16.msra.mxu0 %v2512
      %2768 = vmatprep.subr.bf16.mxu0 %v2507
      %2769 = vmatpush2.bf16.msra.mxu0 %v2506
      %2770 = vmatprep.subr.bf16.mxu0 %v2501
      %2771 = vmatpush2.bf16.msra.mxu0 %v2500
      %2772 = vmatprep.subr.bf16.mxu0 %v2495
      %2773 = vmatpush2.bf16.msra.mxu0 %v2494
      %2774 = vmatprep.subr.bf16.mxu0 %v2489
      %2775 = vmatpush2.bf16.msra.mxu0 %v2488
      %2776 = vmatprep.subr.bf16.mxu0 %v2483
      %2777 = vmatpush2.bf16.msra.mxu0 %v2482
      %2778 = vmatprep.subr.bf16.mxu0 %v2477
      %2779 = vmatpush2.bf16.msra.mxu0 %v2476
      %2780 = vmatprep.subr.bf16.mxu0 %v2471
      %2781 = vmatpush2.bf16.msra.mxu0 %v2470
      %2782 = vmatprep.mubr.bf16.mxu0 %v1930
      %2783 = vmatmul.mubr.bf16.gmra.mxu0 %v1929
      %v2784 = vpop.f32.mrf.mxu0
      %v2785 = vadd.f32 %v1921, %v2784
      %v2786 = vpop.f32.mrf.mxu0
      %v2787 = vadd.f32 %v1921, %v2786
      %v2788 = vpop.f32.mrf.mxu0
      %v2789 = vpop.f32.mrf.mxu0
      %2790 = vdwg.mxu0
      %2791 = vmatprep.subr.bf16.mxu0 %v2561
      %2792 = vmatpush1.bf16.msra.mxu0 %v2560
      %2793 = vmatprep.subr.bf16.mxu0 %v2555
      %2794 = vmatpush1.bf16.msra.mxu0 %v2554
      %2795 = vmatprep.subr.bf16.mxu0 %v2549
      %2796 = vmatpush1.bf16.msra.mxu0 %v2548
      %2797 = vmatprep.subr.bf16.mxu0 %v2543
      %2798 = vmatpush1.bf16.msra.mxu0 %v2542
      %2799 = vmatprep.subr.bf16.mxu0 %v2537
      %2800 = vmatpush1.bf16.msra.mxu0 %v2536
      %2801 = vmatprep.subr.bf16.mxu0 %v2531
      %2802 = vmatpush1.bf16.msra.mxu0 %v2530
      %2803 = vmatprep.subr.bf16.mxu0 %v2525
      %2804 = vmatpush1.bf16.msra.mxu0 %v2524
      %2805 = vmatprep.subr.bf16.mxu0 %v2519
      %2806 = vmatpush1.bf16.msra.mxu0 %v2518
      %2807 = vmatprep.subr.bf16.mxu0 0
      %2808 = vmatpush2.bf16.msra.mxu0 0
      %2809 = vmatprep.subr.bf16.mxu0 0
      %2810 = vmatpush2.bf16.msra.mxu0 0
      %2811 = vmatprep.subr.bf16.mxu0 0
      %2812 = vmatpush2.bf16.msra.mxu0 0
      %2813 = vmatprep.subr.bf16.mxu0 0
      %2814 = vmatpush2.bf16.msra.mxu0 0
      %2815 = vmatprep.subr.bf16.mxu0 0
      %2816 = vmatpush2.bf16.msra.mxu0 0
      %2817 = vmatprep.subr.bf16.mxu0 %v2579
      %2818 = vmatpush2.bf16.msra.mxu0 %v2578
      %2819 = vmatprep.subr.bf16.mxu0 %v2573
      %2820 = vmatpush2.bf16.msra.mxu0 %v2572
      %2821 = vmatprep.subr.bf16.mxu0 %v2567
      %2822 = vmatpush2.bf16.msra.mxu0 %v2566
      %2823 = vmatprep.mubr.bf16.mxu0 %v2748
      %2824 = vmatmul.mubr.bf16.gmra.mxu0 %v1931
      %v2825 = vpop.f32.mrf.mxu0
      %v2826 = vadd.f32 %v2785, %v2825
      %v2827 = vpop.f32.mrf.mxu0
      %v2828 = vadd.f32 %v2787, %v2827
      %v2829 = vpop.f32.mrf.mxu0
      %v2830 = vpop.f32.mrf.mxu0
      %2831 = vdwg.mxu0
      %2832 = vmatprep.subr.bf16.mxu0 %v2467
      %2833 = vmatpush1.bf16.msra.mxu0 %v2466
      %2834 = vmatprep.subr.bf16.mxu0 %v2461
      %2835 = vmatpush1.bf16.msra.mxu0 %v2460
      %2836 = vmatprep.subr.bf16.mxu0 %v2455
      %2837 = vmatpush1.bf16.msra.mxu0 %v2454
      %2838 = vmatprep.subr.bf16.mxu0 %v2449
      %2839 = vmatpush1.bf16.msra.mxu0 %v2448
      %2840 = vmatprep.subr.bf16.mxu0 %v2443
      %2841 = vmatpush1.bf16.msra.mxu0 %v2442
      %2842 = vmatprep.subr.bf16.mxu0 %v2437
      %2843 = vmatpush1.bf16.msra.mxu0 %v2436
      %2844 = vmatprep.subr.bf16.mxu0 %v2431
      %2845 = vmatpush1.bf16.msra.mxu0 %v2430
      %2846 = vmatprep.subr.bf16.mxu0 %v2425
      %2847 = vmatpush1.bf16.msra.mxu0 %v2424
      %2848 = vmatprep.subr.bf16.mxu0 %v2515
      %2849 = vmatpush2.bf16.msra.mxu0 %v2514
      %2850 = vmatprep.subr.bf16.mxu0 %v2509
      %2851 = vmatpush2.bf16.msra.mxu0 %v2508
      %2852 = vmatprep.subr.bf16.mxu0 %v2503
      %2853 = vmatpush2.bf16.msra.mxu0 %v2502
      %2854 = vmatprep.subr.bf16.mxu0 %v2497
      %2855 = vmatpush2.bf16.msra.mxu0 %v2496
      %2856 = vmatprep.subr.bf16.mxu0 %v2491
      %2857 = vmatpush2.bf16.msra.mxu0 %v2490
      %2858 = vmatprep.subr.bf16.mxu0 %v2485
      %2859 = vmatpush2.bf16.msra.mxu0 %v2484
      %2860 = vmatprep.subr.bf16.mxu0 %v2479
      %2861 = vmatpush2.bf16.msra.mxu0 %v2478
      %2862 = vmatprep.subr.bf16.mxu0 %v2473
      %2863 = vmatpush2.bf16.msra.mxu0 %v2472
      %2864 = vmatprep.mubr.bf16.mxu0 %v1930
      %2865 = vmatmul.mubr.bf16.gmra.mxu0 %v1929
      %v2866 = vpop.f32.mrf.mxu0
      %v2867 = vadd.f32 %v1921, %v2866
      %v2868 = vpop.f32.mrf.mxu0
      %v2869 = vadd.f32 %v1921, %v2868
      %v2870 = vpop.f32.mrf.mxu0
      %v2871 = vpop.f32.mrf.mxu0
      %2872 = vdwg.mxu0
      %2873 = vmatprep.subr.bf16.mxu0 %v2563
      %2874 = vmatpush1.bf16.msra.mxu0 %v2562
      %2875 = vmatprep.subr.bf16.mxu0 %v2557
      %2876 = vmatpush1.bf16.msra.mxu0 %v2556
      %2877 = vmatprep.subr.bf16.mxu0 %v2551
      %2878 = vmatpush1.bf16.msra.mxu0 %v2550
      %2879 = vmatprep.subr.bf16.mxu0 %v2545
      %2880 = vmatpush1.bf16.msra.mxu0 %v2544
      %2881 = vmatprep.subr.bf16.mxu0 %v2539
      %2882 = vmatpush1.bf16.msra.mxu0 %v2538
      %2883 = vmatprep.subr.bf16.mxu0 %v2533
      %2884 = vmatpush1.bf16.msra.mxu0 %v2532
      %2885 = vmatprep.subr.bf16.mxu0 %v2527
      %2886 = vmatpush1.bf16.msra.mxu0 %v2526
      %2887 = vmatprep.subr.bf16.mxu0 %v2521
      %2888 = vmatpush1.bf16.msra.mxu0 %v2520
      %2889 = vmatprep.subr.bf16.mxu0 0
      %2890 = vmatpush2.bf16.msra.mxu0 0
      %2891 = vmatprep.subr.bf16.mxu0 0
      %2892 = vmatpush2.bf16.msra.mxu0 0
      %2893 = vmatprep.subr.bf16.mxu0 0
      %2894 = vmatpush2.bf16.msra.mxu0 0
      %2895 = vmatprep.subr.bf16.mxu0 0
      %2896 = vmatpush2.bf16.msra.mxu0 0
      %2897 = vmatprep.subr.bf16.mxu0 0
      %2898 = vmatpush2.bf16.msra.mxu0 0
      %2899 = vmatprep.subr.bf16.mxu0 %v2581
      %2900 = vmatpush2.bf16.msra.mxu0 %v2580
      %2901 = vmatprep.subr.bf16.mxu0 %v2575
      %2902 = vmatpush2.bf16.msra.mxu0 %v2574
      %2903 = vmatprep.subr.bf16.mxu0 %v2569
      %2904 = vmatpush2.bf16.msra.mxu0 %v2568
      %2905 = vmatprep.mubr.bf16.mxu0 %v2748
      %2906 = vmatmul.mubr.bf16.gmra.mxu0 %v1931
      %v2907 = vpop.f32.mrf.mxu0
      %v2908 = vadd.f32 %v2867, %v2907
      %v2909 = vpop.f32.mrf.mxu0
      %v2910 = vadd.f32 %v2869, %v2909
      %v2911 = vpop.f32.mrf.mxu0
      %v2912 = vpop.f32.mrf.mxu0
      %2913 = vdwg.mxu0
      %2914 = vmatprep.subr.bf16.mxu0 %v2469
      %2915 = vmatpush1.bf16.msra.mxu0 %v2468
      %2916 = vmatprep.subr.bf16.mxu0 %v2463
      %2917 = vmatpush1.bf16.msra.mxu0 %v2462
      %2918 = vmatprep.subr.bf16.mxu0 %v2457
      %2919 = vmatpush1.bf16.msra.mxu0 %v2456
      %2920 = vmatprep.subr.bf16.mxu0 %v2451
      %2921 = vmatpush1.bf16.msra.mxu0 %v2450
      %2922 = vmatprep.subr.bf16.mxu0 %v2445
      %2923 = vmatpush1.bf16.msra.mxu0 %v2444
      %2924 = vmatprep.subr.bf16.mxu0 %v2439
      %2925 = vmatpush1.bf16.msra.mxu0 %v2438
      %2926 = vmatprep.subr.bf16.mxu0 %v2433
      %2927 = vmatpush1.bf16.msra.mxu0 %v2432
      %2928 = vmatprep.subr.bf16.mxu0 %v2427
      %2929 = vmatpush1.bf16.msra.mxu0 %v2426
      %2930 = vmatprep.subr.bf16.mxu0 %v2517
      %2931 = vmatpush2.bf16.msra.mxu0 %v2516
      %2932 = vmatprep.subr.bf16.mxu0 %v2511
      %2933 = vmatpush2.bf16.msra.mxu0 %v2510
      %2934 = vmatprep.subr.bf16.mxu0 %v2505
      %2935 = vmatpush2.bf16.msra.mxu0 %v2504
      %2936 = vmatprep.subr.bf16.mxu0 %v2499
      %2937 = vmatpush2.bf16.msra.mxu0 %v2498
      %2938 = vmatprep.subr.bf16.mxu0 %v2493
      %2939 = vmatpush2.bf16.msra.mxu0 %v2492
      %2940 = vmatprep.subr.bf16.mxu0 %v2487
      %2941 = vmatpush2.bf16.msra.mxu0 %v2486
      %2942 = vmatprep.subr.bf16.mxu0 %v2481
      %2943 = vmatpush2.bf16.msra.mxu0 %v2480
      %2944 = vmatprep.subr.bf16.mxu0 %v2475
      %2945 = vmatpush2.bf16.msra.mxu0 %v2474
      %2946 = vmatprep.mubr.bf16.mxu0 %v1930
      %2947 = vmatmul.mubr.bf16.gmra.mxu0 %v1929
      %v2948 = vpop.f32.mrf.mxu0
      %v2949 = vadd.f32 %v1921, %v2948
      %v2950 = vpop.f32.mrf.mxu0
      %v2951 = vadd.f32 %v1921, %v2950
      %v2952 = vpop.f32.mrf.mxu0
      %v2953 = vpop.f32.mrf.mxu0
      %2954 = vdwg.mxu0
      %2955 = vmatprep.subr.bf16.mxu0 %v2565
      %2956 = vmatpush1.bf16.msra.mxu0 %v2564
      %2957 = vmatprep.subr.bf16.mxu0 %v2559
      %2958 = vmatpush1.bf16.msra.mxu0 %v2558
      %2959 = vmatprep.subr.bf16.mxu0 %v2553
      %2960 = vmatpush1.bf16.msra.mxu0 %v2552
      %2961 = vmatprep.subr.bf16.mxu0 %v2547
      %2962 = vmatpush1.bf16.msra.mxu0 %v2546
      %2963 = vmatprep.subr.bf16.mxu0 %v2541
      %2964 = vmatpush1.bf16.msra.mxu0 %v2540
      %2965 = vmatprep.subr.bf16.mxu0 %v2535
      %2966 = vmatpush1.bf16.msra.mxu0 %v2534
      %2967 = vmatprep.subr.bf16.mxu0 %v2529
      %2968 = vmatpush1.bf16.msra.mxu0 %v2528
      %2969 = vmatprep.subr.bf16.mxu0 %v2523
      %2970 = vmatpush1.bf16.msra.mxu0 %v2522
      %2971 = vmatprep.subr.bf16.mxu0 0
      %2972 = vmatpush2.bf16.msra.mxu0 0
      %2973 = vmatprep.subr.bf16.mxu0 0
      %2974 = vmatpush2.bf16.msra.mxu0 0
      %2975 = vmatprep.subr.bf16.mxu0 0
      %2976 = vmatpush2.bf16.msra.mxu0 0
      %2977 = vmatprep.subr.bf16.mxu0 0
      %2978 = vmatpush2.bf16.msra.mxu0 0
      %2979 = vmatprep.subr.bf16.mxu0 0
      %2980 = vmatpush2.bf16.msra.mxu0 0
      %2981 = vmatprep.subr.bf16.mxu0 %v2583
      %2982 = vmatpush2.bf16.msra.mxu0 %v2582
      %2983 = vmatprep.subr.bf16.mxu0 %v2577
      %2984 = vmatpush2.bf16.msra.mxu0 %v2576
      %2985 = vmatprep.subr.bf16.mxu0 %v2571
      %2986 = vmatpush2.bf16.msra.mxu0 %v2570
      %2987 = vmatprep.mubr.bf16.mxu0 %v2748
      %2988 = vmatmul.mubr.bf16.gmra.mxu0 %v1931
      %v2989 = vpop.f32.mrf.mxu0
      %v2990 = vadd.f32 %v2949, %v2989
      %v2991 = vpop.f32.mrf.mxu0
      %v2992 = vadd.f32 %v2951, %v2991
      %v2993 = vpop.f32.mrf.mxu0
      %v2994 = vpop.f32.mrf.mxu0
      %2995 = vdwg.mxu0
      %v2996 = vmax.f32 %v2826, 0.0
      %v2997 = vmax.f32 %v2828, 0.0
      %v2998 = vmax.f32 %v2908, 0.0
      %v2999 = vmax.f32 %v2910, 0.0
      %v3000 = vmax.f32 %v2990, 0.0
      %v3001 = vmax.f32 %v2992, 0.0
      %3002 = vst [vmem:[%s170] sm:$0xff] %v2996
      %3003 = vst [vmem:[%s170 + $0x8] sm:$0xff] %v2997
      %3004 = vst [vmem:[%s170 + $0x10] sm:$0xff] %v2998
      %3005 = vst [vmem:[%s170 + $0x18] sm:$0xff] %v2999
      %3006 = vst [vmem:[%s170 + $0x20] sm:$0xff] %v3000
      %3007 = vst [vmem:[%s170 + $0x28] sm:$0xff] %v3001
      %p3008 = scmp.lt.s32.totalorder %s14, 1
      %s3009 = scalar_select %p3008, %s14, 1
      %s3010 = smul.addr %s3009, 6
      %s3011 = smul.addr %s3010, 8
      %s3012 = scalar_lea.vmem %s3, %s3011
      // Predicated region
      $region33: #{conv3d_configurable_forward.1} parent=31 // pred_check
        %p3013 = pneg %p100
      $region34: #{conv3d_configurable_forward.1} parent=31 // pred_check_branch
        %3015 = sbr.rel (%p3013) target = $region36
      $region35: #{conv3d_configurable_forward.1} parent=31 // pred_region
        _
      $region36: #{conv3d_configurable_forward.1} parent=31 // pred_fallthru
        _
    $region32: #{conv3d_configurable_forward.1} parent=5 // pred_fallthru
      _
    %p3016 = scmp.le.s32.totalorder 2, %s9
    // Predicated region
    $region37: #{conv3d_configurable_forward.1} parent=5 // pred_check
      %p3017 = pneg %p3016
    $region38: #{conv3d_configurable_forward.1} parent=5 // pred_check_branch
      %3019 = sbr.rel (%p3017) target = $region40
    $region39: #{conv3d_configurable_forward.1} parent=5 // pred_region
      %s3020 = ssub.s32 %s9, 2
      // Predicated region
      $region41: #{conv3d_configurable_forward.1} parent=39 // pred_check
        %p3021 = pneg %p106
      $region42: #{conv3d_configurable_forward.1} parent=39 // pred_check_branch
        %3023 = sbr.rel (%p3021) target = $region44
      $region43: #{conv3d_configurable_forward.1} parent=39 // pred_region
        %p3024 = scmp.lt.s32.totalorder %s15, 1
        %s3025 = scalar_select %p3024, %s15, 1
        %s3026 = smul.addr %s3025, 6
        %s3027 = smul.addr %s3026, 8
        %s3028 = scalar_lea.vmem %s3, %s3027
      $region44: #{conv3d_configurable_forward.1} parent=39 // pred_fallthru
        _
    $region40: #{conv3d_configurable_forward.1} parent=5 // pred_fallthru
      _
  $region6: #{conv3d_configurable_forward.1} parent=0 // loop_footer
    %s13 = sadd.s32 1, %s9
  $region7: #{conv3d_configurable_forward.1} parent=0 // loop_footer_branch
    %8 = sbr.rel target = $region3
  $region8: #{conv3d_configurable_forward.1} parent=0 // loop_exit
    _

</llo_original>
